<compile_context>
chip_gen: v6e
topology: v6e:2x2x1
jax: 0.10.0
libtpu: 0.0.40
codegen_flags: <defaults>
</compile_context>

<pallas_src>
import jax
import jax.numpy as jnp
from jax.experimental import pallas as pl
from jax.experimental.pallas import tpu as pltpu


def mlp_kernel(jd_ids_ref, res_ids_ref, jd_tab_ref, res_tab_ref,
               w1_jd_ref, w1_res_ref, b1_ref, w2_ref, b2_ref, w3_ref, b3_ref,
               o_ref):
    """One batch tile, fully 'transposed': features on sublanes, batch on lanes.

    jd_ids_ref / res_ids_ref: (1, L*tile_b) int32, laid out position-major /
    batch-minor so each L-slice of tile_b lanes is one sequence position.
    """
    f32 = jnp.float32
    n_lanes = jd_ids_ref.shape[1]          # L * tile_b
    tile_b = o_ref.shape[1]
    L = n_lanes // tile_b

    def gather_max(ids_ref, tab_t_ref):
        n_word = tab_t_ref.shape[1]
        # One-hot for ALL L positions at once -> a single MXU matmul per table
        # (table pushed to MXU weight registers once, RHS N = L*tile_b).
        w_iota = jax.lax.broadcasted_iota(jnp.int32, (n_word, n_lanes), 0)
        onehot = (ids_ref[...] == w_iota).astype(f32)           # (n_word, L*tile_b)
        gathered = jnp.dot(tab_t_ref[...], onehot,
                           preferred_element_type=f32)          # (E, L*tile_b)
        # Sequence max over L static, 128-aligned lane slices (no reshape ->
        # no lane/sublane relayout).
        emb = gathered[:, 0:tile_b]
        for l in range(1, L):
            emb = jnp.maximum(emb, gathered[:, l * tile_b:(l + 1) * tile_b])
        return emb                                              # (E, tile_b)

    jd_max = gather_max(jd_ids_ref, jd_tab_ref)
    res_max = gather_max(res_ids_ref, res_tab_ref)

    # cat([jd, resume], -1) @ W1.T  ==  W1[:, :E] @ jd_T + W1[:, E:] @ res_T
    # (W1 is pre-split in the wrapper -> no in-kernel weight slicing).
    h1 = (jnp.dot(w1_jd_ref[...], jd_max, preferred_element_type=f32)
          + jnp.dot(w1_res_ref[...], res_max, preferred_element_type=f32)
          + b1_ref[...])
    h1 = jnp.maximum(h1, 0.0)                                   # ReLU

    h2 = jnp.dot(w2_ref[...], h1, preferred_element_type=f32) + b2_ref[...]
    h2 = jnp.maximum(h2, 0.0)                                   # ReLU

    y = jnp.dot(w3_ref[...], h2, preferred_element_type=f32) + b3_ref[...]
    o_ref[...] = jax.nn.sigmoid(y)                              # (1, tile_b)


def _pick_tile_b(B, max_tile_b=1024):
    """Pick the batch-tile width: as large as useful (amortize per-step
    overhead), but always keep >= 2 tiles so the 'parallel' batch axis can
    shard across v7x's two TensorCores."""
    b_pad128 = pl.cdiv(B, 128) * 128
    if b_pad128 <= 128:
        return 128
    tile = min(max_tile_b, (b_pad128 // 2 // 128) * 128)
    return max(tile, 128)


def mlp_forward(jd_ids, resume_ids, jd_table, resume_table,
                w1, b1, w2, b2, w3, b3, *, tile_b=None):
    """jd_ids/resume_ids: (B, L) int token ids.
    jd_table/resume_table: (n_word, E) float32.
    w1 (H1, 2E), b1 (H1,), w2 (H2, H1), b2 (H2,), w3 (1, H2), b3 (1,)
    in PyTorch nn.Linear (out, in) layout.

    tile_b: batch rows per grid step (multiple of 128).  Default: auto-sized
    up to 1024, keeping at least 2 tiles for v7x megacore sharding.  Per-tile
    VMEM footprint stays well under every generation's limit (<= ~10 MiB at
    tile_b=1024 with n_word=64).
    """
    B, L = jd_ids.shape
    n_word_jd, E = jd_table.shape
    n_word_res, E_res = resume_table.shape
    assert E_res == E, "jd/resume embedding dims must match (cat along features)"
    H1 = w1.shape[0]
    H2 = w2.shape[0]

    if tile_b is None:
        tile_b = _pick_tile_b(B)
    num_tiles = pl.cdiv(B, tile_b)
    b_pad = num_tiles * tile_b

    def prep_ids(ids):
        # (B, L) -> (1, num_tiles*L*tile_b), position-major / batch-minor per
        # tile, so each kernel block is a single lane-dense (1, L*tile_b) row.
        ids = ids.astype(jnp.int32)
        if b_pad != B:
            ids = jnp.pad(ids, ((0, b_pad - B), (0, 0)))      # pad with token 0
        ids = ids.reshape(num_tiles, tile_b, L).transpose(0, 2, 1)
        return ids.reshape(1, num_tiles * L * tile_b)

    jd_flat = prep_ids(jd_ids)
    res_flat = prep_ids(resume_ids)

    # One-time, tiny layout prep (weights/tables are only a few KB).
    jd_tab_t = jd_table.T            # (E, n_word_jd)
    res_tab_t = resume_table.T       # (E, n_word_res)
    w1_jd = w1[:, :E]                # (H1, E)
    w1_res = w1[:, E:]               # (H1, E)
    b1c = b1.reshape(H1, 1)
    b2c = b2.reshape(H2, 1)
    b3c = b3.reshape(1, 1)

    # Constant-index specs: DMA'd once, VMEM-resident across all grid steps.
    def const(shape):
        return pl.BlockSpec(shape, lambda i: (0, 0))

    ids_spec = pl.BlockSpec((1, L * tile_b), lambda i: (0, i))

    out = pl.pallas_call(
        mlp_kernel,
        out_shape=jax.ShapeDtypeStruct((1, b_pad), jnp.float32),
        grid=(num_tiles,),
        in_specs=[
            ids_spec, ids_spec,                                 # jd / resume ids
            const((E, n_word_jd)), const((E, n_word_res)),      # embedding tables (T)
            const((H1, E)), const((H1, E)), const((H1, 1)),
            const((H2, H1)), const((H2, 1)),
            const((1, H2)), const((1, 1)),
        ],
        out_specs=pl.BlockSpec((1, tile_b), lambda i: (0, i)),  # lane-dense
        compiler_params=pltpu.CompilerParams(
            dimension_semantics=("parallel",),   # batch tiles are independent
            vmem_limit_bytes=32 * 1024 * 1024,   # explicit; fits v5e/v6e/v7x
        ),
    )(jd_flat, res_flat, jd_tab_t, res_tab_t,
      w1_jd, w1_res, b1c, w2, b2c, w3, b3c)

    return out[0, :B].reshape(B, 1)


def reference_forward(jd_ids, resume_ids, jd_table, resume_table,
                      w1, b1, w2, b2, w3, b3):
    jd_max = jnp.max(jd_table[jd_ids], axis=1)
    res_max = jnp.max(resume_table[resume_ids], axis=1)
    x = jnp.concatenate([jd_max, res_max], axis=-1)
    h1 = jnp.maximum(x @ w1.T + b1, 0.0)
    h2 = jnp.maximum(h1 @ w2.T + b2, 0.0)
    return jax.nn.sigmoid(h2 @ w3.T + b3)


if __name__ == "__main__":
    # Small synthetic config (auto tile_b -> 128, grid of 2 batch tiles, which
    # exercises the pipeline and the v7x two-core sharding rule).
    n_word, n_position, emb_dim = 64, 16, 32
    B, L = 256, 8
    dim = 2 * emb_dim
    H1, H2 = dim // 2, dim // 4

    keys = jax.random.split(jax.random.PRNGKey(0), 11)
    jd_table = 0.1 * jax.random.normal(keys[0], (n_word, emb_dim), jnp.float32)
    resume_table = 0.1 * jax.random.normal(keys[1], (n_word, emb_dim), jnp.float32)
    # position table exists in __init__ but is unused when weight=False.
    position_table = 0.1 * jax.random.normal(keys[2], (n_position, emb_dim), jnp.float32)

    # PyTorch nn.Linear layout: weight (out, in), bias (out,)
    w1 = 0.1 * jax.random.normal(keys[3], (H1, dim), jnp.float32)
    b1 = 0.1 * jax.random.normal(keys[4], (H1,), jnp.float32)
    w2 = 0.1 * jax.random.normal(keys[5], (H2, H1), jnp.float32)
    b2 = 0.1 * jax.random.normal(keys[6], (H2,), jnp.float32)
    w3 = 0.1 * jax.random.normal(keys[7], (1, H2), jnp.float32)
    b3 = jnp.zeros((1,), jnp.float32)

    jd = jax.random.randint(keys[8], (B, L), 0, n_word)             # token ids
    resume = jax.random.randint(keys[9], (B, L), 0, n_word)         # token ids
    position = jax.random.randint(keys[10], (B, L), 0, n_position)  # unused (weight=False)

    out = mlp_forward(jd, resume, jd_table, resume_table,
                      w1, b1, w2, b2, w3, b3)
    out = jax.block_until_ready(out)

    ref = reference_forward(jd, resume, jd_table, resume_table,
                            w1, b1, w2, b2, w3, b3)
    assert out.shape == (B, 1)
    # Tolerance covers possible MXU reduced-precision passes on the in-kernel
    # one-hot gather vs. the exact XLA gather in the reference.
    assert jnp.allclose(out, ref, atol=1e-3, rtol=1e-3), \
        float(jnp.max(jnp.abs(out - ref)))

    print("KERNEL_OK")
</pallas_src>

<mosaic_0001>
module attributes {stable_mosaic.version = 11 : i64} {
  func.func @mlp_kernel(%arg0: i32, %arg1: memref<1x1024xi32, #tpu.memory_space<vmem>>, %arg2: memref<1x1024xi32, #tpu.memory_space<vmem>>, %arg3: memref<32x64xf32, #tpu.memory_space<vmem>>, %arg4: memref<32x64xf32, #tpu.memory_space<vmem>>, %arg5: memref<32x32xf32, #tpu.memory_space<vmem>>, %arg6: memref<32x32xf32, #tpu.memory_space<vmem>>, %arg7: memref<32x1xf32, #tpu.memory_space<vmem>>, %arg8: memref<16x32xf32, #tpu.memory_space<vmem>>, %arg9: memref<16x1xf32, #tpu.memory_space<vmem>>, %arg10: memref<1x16xf32, #tpu.memory_space<vmem>>, %arg11: memref<1x1xf32, #tpu.memory_space<vmem>>, %arg12: memref<1x128xf32, #tpu.memory_space<vmem>>) attributes {dimension_semantics = [#tpu.dimension_semantics<parallel>], iteration_bounds = array<i64: 2>, scalar_prefetch = 0 : i64, scratch_operands = 0 : i64, tpu.core_type = #tpu.core_type<tc>, window_params = [{transform_indices = @transform_0, window_bounds = array<i64: 1, 1024>}, {transform_indices = @transform_1, window_bounds = array<i64: 1, 1024>}, {pipeline_mode = #tpu.pipeline_mode<synchronous>, transform_indices = @transform_2, window_bounds = array<i64: 32, 64>}, {pipeline_mode = #tpu.pipeline_mode<synchronous>, transform_indices = @transform_3, window_bounds = array<i64: 32, 64>}, {pipeline_mode = #tpu.pipeline_mode<synchronous>, transform_indices = @transform_4, window_bounds = array<i64: 32, 32>}, {pipeline_mode = #tpu.pipeline_mode<synchronous>, transform_indices = @transform_5, window_bounds = array<i64: 32, 32>}, {pipeline_mode = #tpu.pipeline_mode<synchronous>, transform_indices = @transform_6, window_bounds = array<i64: 32, 1>}, {pipeline_mode = #tpu.pipeline_mode<synchronous>, transform_indices = @transform_7, window_bounds = array<i64: 16, 32>}, {pipeline_mode = #tpu.pipeline_mode<synchronous>, transform_indices = @transform_8, window_bounds = array<i64: 16, 1>}, {pipeline_mode = #tpu.pipeline_mode<synchronous>, transform_indices = @transform_9, window_bounds = array<i64: 1, 16>}, {pipeline_mode = #tpu.pipeline_mode<synchronous>, transform_indices = @transform_10, window_bounds = array<i64: 1, 1>}, {transform_indices = @transform_11, window_bounds = array<i64: 1, 128>}]} {
    %0 = tpu.iota {dimensions = array<i32: 0>} : vector<64x1024xi32>
    %c0 = arith.constant 0 : index
    %c0_0 = arith.constant 0 : index
    %1 = vector.load %arg1[%c0, %c0_0] : memref<1x1024xi32, #tpu.memory_space<vmem>>, vector<1x1024xi32>
    %2 = vector.broadcast %1 : vector<1x1024xi32> to vector<64x1024xi32>
    %3 = arith.cmpi eq, %2, %0 : vector<64x1024xi32>
    %4 = arith.extui %3 : vector<64x1024xi1> to vector<64x1024xi32>
    %5 = arith.sitofp %4 : vector<64x1024xi32> to vector<64x1024xf32>
    %c0_1 = arith.constant 0 : index
    %c0_2 = arith.constant 0 : index
    %6 = vector.load %arg3[%c0_1, %c0_2] : memref<32x64xf32, #tpu.memory_space<vmem>>, vector<32x64xf32>
    %cst = arith.constant dense<0.000000e+00> : vector<32x1024xf32>
    %7 = tpu.matmul %6, %5, %cst {dimension_numbers = #tpu.dot_dimension_numbers<[1], [0], [0], [1], [0, 0, 1, 1], [], []>} : vector<32x64xf32>, vector<64x1024xf32>, vector<32x1024xf32> -> vector<32x1024xf32>
    %8 = vector.extract_strided_slice %7 {offsets = [0, 0], sizes = [32, 128], strides = [1, 1]} : vector<32x1024xf32> to vector<32x128xf32>
    %9 = vector.extract_strided_slice %7 {offsets = [0, 128], sizes = [32, 128], strides = [1, 1]} : vector<32x1024xf32> to vector<32x128xf32>
    %10 = arith.maximumf %8, %9 : vector<32x128xf32>
    %11 = vector.extract_strided_slice %7 {offsets = [0, 256], sizes = [32, 128], strides = [1, 1]} : vector<32x1024xf32> to vector<32x128xf32>
    %12 = arith.maximumf %10, %11 : vector<32x128xf32>
    %13 = vector.extract_strided_slice %7 {offsets = [0, 384], sizes = [32, 128], strides = [1, 1]} : vector<32x1024xf32> to vector<32x128xf32>
    %14 = arith.maximumf %12, %13 : vector<32x128xf32>
    %15 = vector.extract_strided_slice %7 {offsets = [0, 512], sizes = [32, 128], strides = [1, 1]} : vector<32x1024xf32> to vector<32x128xf32>
    %16 = arith.maximumf %14, %15 : vector<32x128xf32>
    %17 = vector.extract_strided_slice %7 {offsets = [0, 640], sizes = [32, 128], strides = [1, 1]} : vector<32x1024xf32> to vector<32x128xf32>
    %18 = arith.maximumf %16, %17 : vector<32x128xf32>
    %19 = vector.extract_strided_slice %7 {offsets = [0, 768], sizes = [32, 128], strides = [1, 1]} : vector<32x1024xf32> to vector<32x128xf32>
    %20 = arith.maximumf %18, %19 : vector<32x128xf32>
    %21 = vector.extract_strided_slice %7 {offsets = [0, 896], sizes = [32, 128], strides = [1, 1]} : vector<32x1024xf32> to vector<32x128xf32>
    %22 = arith.maximumf %20, %21 : vector<32x128xf32>
    %23 = tpu.iota {dimensions = array<i32: 0>} : vector<64x1024xi32>
    %c0_3 = arith.constant 0 : index
    %c0_4 = arith.constant 0 : index
    %24 = vector.load %arg2[%c0_3, %c0_4] : memref<1x1024xi32, #tpu.memory_space<vmem>>, vector<1x1024xi32>
    %25 = vector.broadcast %24 : vector<1x1024xi32> to vector<64x1024xi32>
    %26 = arith.cmpi eq, %25, %23 : vector<64x1024xi32>
    %27 = arith.extui %26 : vector<64x1024xi1> to vector<64x1024xi32>
    %28 = arith.sitofp %27 : vector<64x1024xi32> to vector<64x1024xf32>
    %c0_5 = arith.constant 0 : index
    %c0_6 = arith.constant 0 : index
    %29 = vector.load %arg4[%c0_5, %c0_6] : memref<32x64xf32, #tpu.memory_space<vmem>>, vector<32x64xf32>
    %cst_7 = arith.constant dense<0.000000e+00> : vector<32x1024xf32>
    %30 = tpu.matmul %29, %28, %cst_7 {dimension_numbers = #tpu.dot_dimension_numbers<[1], [0], [0], [1], [0, 0, 1, 1], [], []>} : vector<32x64xf32>, vector<64x1024xf32>, vector<32x1024xf32> -> vector<32x1024xf32>
    %31 = vector.extract_strided_slice %30 {offsets = [0, 0], sizes = [32, 128], strides = [1, 1]} : vector<32x1024xf32> to vector<32x128xf32>
    %32 = vector.extract_strided_slice %30 {offsets = [0, 128], sizes = [32, 128], strides = [1, 1]} : vector<32x1024xf32> to vector<32x128xf32>
    %33 = arith.maximumf %31, %32 : vector<32x128xf32>
    %34 = vector.extract_strided_slice %30 {offsets = [0, 256], sizes = [32, 128], strides = [1, 1]} : vector<32x1024xf32> to vector<32x128xf32>
    %35 = arith.maximumf %33, %34 : vector<32x128xf32>
    %36 = vector.extract_strided_slice %30 {offsets = [0, 384], sizes = [32, 128], strides = [1, 1]} : vector<32x1024xf32> to vector<32x128xf32>
    %37 = arith.maximumf %35, %36 : vector<32x128xf32>
    %38 = vector.extract_strided_slice %30 {offsets = [0, 512], sizes = [32, 128], strides = [1, 1]} : vector<32x1024xf32> to vector<32x128xf32>
    %39 = arith.maximumf %37, %38 : vector<32x128xf32>
    %40 = vector.extract_strided_slice %30 {offsets = [0, 640], sizes = [32, 128], strides = [1, 1]} : vector<32x1024xf32> to vector<32x128xf32>
    %41 = arith.maximumf %39, %40 : vector<32x128xf32>
    %42 = vector.extract_strided_slice %30 {offsets = [0, 768], sizes = [32, 128], strides = [1, 1]} : vector<32x1024xf32> to vector<32x128xf32>
    %43 = arith.maximumf %41, %42 : vector<32x128xf32>
    %44 = vector.extract_strided_slice %30 {offsets = [0, 896], sizes = [32, 128], strides = [1, 1]} : vector<32x1024xf32> to vector<32x128xf32>
    %45 = arith.maximumf %43, %44 : vector<32x128xf32>
    %c0_8 = arith.constant 0 : index
    %c0_9 = arith.constant 0 : index
    %46 = vector.load %arg5[%c0_8, %c0_9] : memref<32x32xf32, #tpu.memory_space<vmem>>, vector<32x32xf32>
    %cst_10 = arith.constant dense<0.000000e+00> : vector<32x128xf32>
    %47 = tpu.matmul %46, %22, %cst_10 {dimension_numbers = #tpu.dot_dimension_numbers<[1], [0], [0], [1], [0, 0, 1, 1], [], []>} : vector<32x32xf32>, vector<32x128xf32>, vector<32x128xf32> -> vector<32x128xf32>
    %c0_11 = arith.constant 0 : index
    %c0_12 = arith.constant 0 : index
    %48 = vector.load %arg6[%c0_11, %c0_12] : memref<32x32xf32, #tpu.memory_space<vmem>>, vector<32x32xf32>
    %cst_13 = arith.constant dense<0.000000e+00> : vector<32x128xf32>
    %49 = tpu.matmul %48, %45, %cst_13 {dimension_numbers = #tpu.dot_dimension_numbers<[1], [0], [0], [1], [0, 0, 1, 1], [], []>} : vector<32x32xf32>, vector<32x128xf32>, vector<32x128xf32> -> vector<32x128xf32>
    %50 = arith.addf %47, %49 : vector<32x128xf32>
    %c0_14 = arith.constant 0 : index
    %c0_15 = arith.constant 0 : index
    %51 = vector.load %arg7[%c0_14, %c0_15] : memref<32x1xf32, #tpu.memory_space<vmem>>, vector<32x1xf32>
    %52 = vector.broadcast %51 : vector<32x1xf32> to vector<32x128xf32>
    %53 = arith.addf %50, %52 : vector<32x128xf32>
    %cst_16 = arith.constant 0.000000e+00 : f32
    %54 = vector.broadcast %cst_16 : f32 to vector<32x128xf32>
    %55 = arith.maximumf %53, %54 : vector<32x128xf32>
    %c0_17 = arith.constant 0 : index
    %c0_18 = arith.constant 0 : index
    %56 = vector.load %arg8[%c0_17, %c0_18] : memref<16x32xf32, #tpu.memory_space<vmem>>, vector<16x32xf32>
    %cst_19 = arith.constant dense<0.000000e+00> : vector<16x128xf32>
    %57 = tpu.matmul %56, %55, %cst_19 {dimension_numbers = #tpu.dot_dimension_numbers<[1], [0], [0], [1], [0, 0, 1, 1], [], []>} : vector<16x32xf32>, vector<32x128xf32>, vector<16x128xf32> -> vector<16x128xf32>
    %c0_20 = arith.constant 0 : index
    %c0_21 = arith.constant 0 : index
    %58 = vector.load %arg9[%c0_20, %c0_21] : memref<16x1xf32, #tpu.memory_space<vmem>>, vector<16x1xf32>
    %59 = vector.broadcast %58 : vector<16x1xf32> to vector<16x128xf32>
    %60 = arith.addf %57, %59 : vector<16x128xf32>
    %cst_22 = arith.constant 0.000000e+00 : f32
    %61 = vector.broadcast %cst_22 : f32 to vector<16x128xf32>
    %62 = arith.maximumf %60, %61 : vector<16x128xf32>
    %c0_23 = arith.constant 0 : index
    %c0_24 = arith.constant 0 : index
    %63 = vector.load %arg10[%c0_23, %c0_24] : memref<1x16xf32, #tpu.memory_space<vmem>>, vector<1x16xf32>
    %cst_25 = arith.constant dense<0.000000e+00> : vector<1x128xf32>
    %64 = tpu.matmul %63, %62, %cst_25 {dimension_numbers = #tpu.dot_dimension_numbers<[1], [0], [0], [1], [0, 0, 1, 1], [], []>} : vector<1x16xf32>, vector<16x128xf32>, vector<1x128xf32> -> vector<1x128xf32>
    %c0_26 = arith.constant 0 : index
    %c0_27 = arith.constant 0 : index
    %65 = vector.load %arg11[%c0_26, %c0_27] : memref<1x1xf32, #tpu.memory_space<vmem>>, vector<1x1xf32>
    %66 = vector.broadcast %65 : vector<1x1xf32> to vector<1x128xf32>
    %67 = arith.addf %64, %66 : vector<1x128xf32>
    %68 = arith.negf %67 : vector<1x128xf32>
    %69 = math.exp %68 : vector<1x128xf32>
    %cst_28 = arith.constant 1.000000e+00 : f32
    %70 = vector.broadcast %cst_28 : f32 to vector<1x128xf32>
    %71 = arith.addf %70, %69 : vector<1x128xf32>
    %72 = arith.divf %70, %71 : vector<1x128xf32>
    %c0_29 = arith.constant 0 : index
    %c0_30 = arith.constant 0 : index
    %73 = vector.load %arg12[%c0_29, %c0_30] : memref<1x128xf32, #tpu.memory_space<vmem>>, vector<1x128xf32>
    tpu.vector_store %arg12[%c0_29, %c0_30], %72 {strides = array<i32>} : memref<1x128xf32, #tpu.memory_space<vmem>>, vector<1x128xf32>,
    return
  }
  func.func @transform_0(%arg0: i32) -> (i32, i32) {
    %c0_i32 = arith.constant 0 : i32
    %c0_i32_0 = arith.constant 0 : i32
    return %c0_i32, %arg0 : i32, i32
  }
  func.func @transform_1(%arg0: i32) -> (i32, i32) {
    %c0_i32 = arith.constant 0 : i32
    %c0_i32_0 = arith.constant 0 : i32
    return %c0_i32, %arg0 : i32, i32
  }
  func.func @transform_2(%arg0: i32) -> (i32, i32) {
    %c0_i32 = arith.constant 0 : i32
    %c0_i32_0 = arith.constant 0 : i32
    %c0_i32_1 = arith.constant 0 : i32
    return %c0_i32, %c0_i32_0 : i32, i32
  }
  func.func @transform_3(%arg0: i32) -> (i32, i32) {
    %c0_i32 = arith.constant 0 : i32
    %c0_i32_0 = arith.constant 0 : i32
    %c0_i32_1 = arith.constant 0 : i32
    return %c0_i32, %c0_i32_0 : i32, i32
  }
  func.func @transform_4(%arg0: i32) -> (i32, i32) {
    %c0_i32 = arith.constant 0 : i32
    %c0_i32_0 = arith.constant 0 : i32
    %c0_i32_1 = arith.constant 0 : i32
    return %c0_i32, %c0_i32_0 : i32, i32
  }
  func.func @transform_5(%arg0: i32) -> (i32, i32) {
    %c0_i32 = arith.constant 0 : i32
    %c0_i32_0 = arith.constant 0 : i32
    %c0_i32_1 = arith.constant 0 : i32
    return %c0_i32, %c0_i32_0 : i32, i32
  }
  func.func @transform_6(%arg0: i32) -> (i32, i32) {
    %c0_i32 = arith.constant 0 : i32
    %c0_i32_0 = arith.constant 0 : i32
    %c0_i32_1 = arith.constant 0 : i32
    return %c0_i32, %c0_i32_0 : i32, i32
  }
  func.func @transform_7(%arg0: i32) -> (i32, i32) {
    %c0_i32 = arith.constant 0 : i32
    %c0_i32_0 = arith.constant 0 : i32
    %c0_i32_1 = arith.constant 0 : i32
    return %c0_i32, %c0_i32_0 : i32, i32
  }
  func.func @transform_8(%arg0: i32) -> (i32, i32) {
    %c0_i32 = arith.constant 0 : i32
    %c0_i32_0 = arith.constant 0 : i32
    %c0_i32_1 = arith.constant 0 : i32
    return %c0_i32, %c0_i32_0 : i32, i32
  }
  func.func @transform_9(%arg0: i32) -> (i32, i32) {
    %c0_i32 = arith.constant 0 : i32
    %c0_i32_0 = arith.constant 0 : i32
    %c0_i32_1 = arith.constant 0 : i32
    return %c0_i32, %c0_i32_0 : i32, i32
  }
  func.func @transform_10(%arg0: i32) -> (i32, i32) {
    %c0_i32 = arith.constant 0 : i32
    %c0_i32_0 = arith.constant 0 : i32
    %c0_i32_1 = arith.constant 0 : i32
    return %c0_i32, %c0_i32_0 : i32, i32
  }
  func.func @transform_11(%arg0: i32) -> (i32, i32) {
    %c0_i32 = arith.constant 0 : i32
    %c0_i32_0 = arith.constant 0 : i32
    return %c0_i32, %arg0 : i32, i32
  }
}

</mosaic_0001>

<llo_original>
// kernel: tpu_custom_call.1
$region0: #{tpu_custom_call.1}
  #allocation0 [shape = 'u32[]', space=smem, size = 0x4, offset = 0x4, fixed_abs, tag = 'smem constant byte address 0x4 - core index']
  #allocation1 [shape = 'u32[144,128]{1,0:T(1,128)}', space=vmem, size = 0x12000, scoped, tag = 'internal scratch']
  #allocation2 [shape = 'f32[1,1]{1,0:T(1,128)S(1)}', space=vmem, size = 0x200, scoped, tag = 'scoped memory for tpu_custom_call.1']
  %s0 = inlined_call_operand.vmem [shape: s32[1,2048], index: 0, kind: input, shape index: {}]
  %s1 = inlined_call_operand.hbm [shape: s32[1,2048], index: 1, kind: input, shape index: {}]
  %s2 = inlined_call_operand.vmem [shape: f32[32,64], index: 2, kind: input, shape index: {}]
  %s3 = inlined_call_operand.hbm [shape: f32[32,64], index: 3, kind: input, shape index: {}]
  %s4 = inlined_call_operand.hbm [shape: f32[32,32], index: 4, kind: input, shape index: {}]
  %s5 = inlined_call_operand.hbm [shape: f32[32,32], index: 5, kind: input, shape index: {}]
  %s6 = inlined_call_operand.vmem [shape: f32[32,1], index: 6, kind: input, shape index: {}]
  %s7 = inlined_call_operand.vmem [shape: f32[16,32], index: 7, kind: input, shape index: {}]
  %s8 = inlined_call_operand.vmem [shape: f32[16,1], index: 8, kind: input, shape index: {}]
  %s9 = inlined_call_operand.vmem [shape: f32[1,16], index: 9, kind: input, shape index: {}]
  %s10 = inlined_call_operand.<no memory space> [shape: f32[1,1], index: 10, kind: input, shape index: {}]
  %s11 = inlined_call_operand.hbm [shape: f32[1,256], index: 11, kind: output, shape index: {}]
  %s12 = sld [smem:[#allocation0]]
  $region93: #{tpu_custom_call.1} parent=0
    _
  %s14 = ssub.s32 1, %s12
  %s15 = scalar_select 0, %s14, %s12
  %v16 = vstv %s10
  %17 = vst [vmem:[#allocation2] sm:$0x1] %v16
  $region1: #{tpu_custom_call.1} parent=0
    #allocation3 [shape = 'u8[8192]{0}', space=vmem, size = 0x2000, scoped, tag = 'input window, operand 1']
    #allocation4 [shape = 's32[2]{0}', space=sflag, size = 0x8, scoped, tag = 'scoped memory for tpu_custom_call.1']
    #allocation5 [shape = 's32[2]{0}', space=sflag, size = 0x8, scoped, tag = 'scoped memory for tpu_custom_call.1']
    #allocation6 [shape = 'u8[16384]{0}', space=vmem, size = 0x4000, scoped, tag = 'input window, operand 3, single buffered']
    #allocation7 [shape = 's32[1]{0}', space=sflag, size = 0x4, scoped, tag = 'scoped memory for tpu_custom_call.1']
    #allocation8 [shape = 'u8[16384]{0}', space=vmem, size = 0x4000, scoped, tag = 'input window, operand 4, single buffered']
    #allocation9 [shape = 'u8[16384]{0}', space=vmem, size = 0x4000, scoped, tag = 'input window, operand 5, single buffered']
    #allocation10 [shape = 's32[1]{0}', space=sflag, size = 0x4, scoped, tag = 'scoped memory for tpu_custom_call.1']
    #allocation11 [shape = 'u8[1024]{0}', space=vmem, size = 0x400, scoped, tag = 'output window, operand 0']
    %18 = vsyncpa [#allocation4], 0
    %s19 = scalar_lea.sflag [#allocation4], 1
    %20 = vsyncpa %s19, 0
    %21 = vsyncpa [#allocation7], 0
    %22 = vsyncpa [#allocation10], 0
    %23 = vsyncpa [#allocation5], 0
    %s24 = scalar_lea.sflag [#allocation5], 1
    %25 = vsyncpa %s24, 0
    loop: start=0, step=1, limit=4
    $region2: #{tpu_custom_call.1} parent=1 // loop_pre_header
      _
    $region3: #{tpu_custom_call.1} parent=1 // loop_header
      %s27 = sphi 0, %s31
      %p28 = scmp.ge.s32.totalorder %s27, 4
      %s37 = sphi 0, %s39
      %s40 = sphi 0, %s37
      %s41 = sphi 0, %s40
      %s57 = sphi 0, %s41
      %s63 = sphi 0, %s65
      %s66 = sphi 0, %s63
      %s67 = sphi 0, %s66
      %s83 = sphi 0, %s67
      %s87 = sphi 0, %s87
      %s89 = sphi 0, %s87
      %s90 = sphi 0, %s89
      %s104 = sphi 0, %s90
      %s108 = sphi 0, %s108
      %s110 = sphi 0, %s108
      %s111 = sphi 0, %s110
      %s125 = sphi 0, %s111
      %s129 = sphi 0, %s129
      %s131 = sphi 0, %s129
      %s132 = sphi 0, %s131
      %s146 = sphi 0, %s132
      %s150 = sphi 0, %s150
      %s152 = sphi 0, %s150
      %s153 = sphi 0, %s152
      %s167 = sphi 0, %s153
      %s171 = sphi 0, %s171
      %s173 = sphi 0, %s171
      %s174 = sphi 0, %s173
      %s188 = sphi 0, %s174
      %s192 = sphi 0, %s192
      %s194 = sphi 0, %s192
      %s195 = sphi 0, %s194
      %s209 = sphi 0, %s195
      %s213 = sphi 0, %s213
      %s215 = sphi 0, %s213
      %s216 = sphi 0, %s215
      %s230 = sphi 0, %s216
      %s234 = sphi 0, %s234
      %s236 = sphi 0, %s234
      %s237 = sphi 0, %s236
      %s251 = sphi 0, %s237
      %s255 = sphi 0, %s255
      %s257 = sphi 0, %s255
      %s258 = sphi 0, %s257
      %s272 = sphi 0, %s258
      %s278 = sphi 0, %s280
      %s281 = sphi 0, %s278
      %s282 = sphi 0, %s281
      %s298 = sphi 0, %s282
    $region4: #{tpu_custom_call.1} parent=1 // loop_header_branch
      %30 = sbr.rel (%p28) target = $region8
    $region5: #{tpu_custom_call.1} parent=1 // loop_body
      %s32 = ssub.s32 %s27, 1
      %s33 = ssub.s32 %s27, 2
      %s34 = sadd.s32 %s27, 1
      %s35 = ssub.s32 %s27, %s34
      %p36 = scmp.eq.s32.totalorder %s35, 0
      %s38 = sadd.s32 %s37, 1
      %s39 = scalar_select %p36, %s37, %s38
      %p42 = pneg %p36
      %p43 = scmp.eq.s32.totalorder %s27, 1
      %p44 = por %p42, %p43
      %p45 = scmp.ne.s32.totalorder %s37, %s40
      %p46 = scmp.eq.s32.totalorder %s27, 0
      %p47 = por %p45, %p46
      %p48 = scmp.ne.s32.totalorder %s37, %s40
      %p49 = scmp.eq.s32.totalorder %s32, 1
      %p50 = por %p48, %p49
      %p51 = scmp.ne.s32.totalorder %s40, %s41
      %p52 = scmp.eq.s32.totalorder %s32, 0
      %p53 = por %p51, %p52
      %p54 = scmp.ne.s32.totalorder %s40, %s41
      %p55 = scmp.eq.s32.totalorder %s33, 1
      %p56 = por %p54, %p55
      %p58 = scmp.ne.s32.totalorder %s41, %s57
      %p59 = scmp.eq.s32.totalorder %s33, 0
      %p60 = por %p58, %p59
      %s61 = ssub.s32 %s27, %s34
      %p62 = scmp.eq.s32.totalorder %s61, 0
      %s64 = sadd.s32 %s63, 1
      %s65 = scalar_select %p62, %s63, %s64
      %p68 = pneg %p62
      %p69 = scmp.eq.s32.totalorder %s27, 1
      %p70 = por %p68, %p69
      %p71 = scmp.ne.s32.totalorder %s63, %s66
      %p72 = scmp.eq.s32.totalorder %s27, 0
      %p73 = por %p71, %p72
      %p74 = scmp.ne.s32.totalorder %s63, %s66
      %p75 = scmp.eq.s32.totalorder %s32, 1
      %p76 = por %p74, %p75
      %p77 = scmp.ne.s32.totalorder %s66, %s67
      %p78 = scmp.eq.s32.totalorder %s32, 0
      %p79 = por %p77, %p78
      %p80 = scmp.ne.s32.totalorder %s66, %s67
      %p81 = scmp.eq.s32.totalorder %s33, 1
      %p82 = por %p80, %p81
      %p84 = scmp.ne.s32.totalorder %s67, %s83
      %p85 = scmp.eq.s32.totalorder %s33, 0
      %p86 = por %p84, %p85
      %s88 = sadd.s32 %s87, 1
      %p91 = scmp.eq.s32.totalorder %s27, 1
      %p92 = scmp.ne.s32.totalorder %s87, %s89
      %p93 = scmp.eq.s32.totalorder %s27, 0
      %p94 = por %p92, %p93
      %p95 = scmp.ne.s32.totalorder %s87, %s89
      %p96 = scmp.eq.s32.totalorder %s32, 1
      %p97 = por %p95, %p96
      %p98 = scmp.ne.s32.totalorder %s89, %s90
      %p99 = scmp.eq.s32.totalorder %s32, 0
      %p100 = por %p98, %p99
      %p101 = scmp.ne.s32.totalorder %s89, %s90
      %p102 = scmp.eq.s32.totalorder %s33, 1
      %p103 = por %p101, %p102
      %p105 = scmp.ne.s32.totalorder %s90, %s104
      %p106 = scmp.eq.s32.totalorder %s33, 0
      %p107 = por %p105, %p106
      %s109 = sadd.s32 %s108, 1
      %p112 = scmp.eq.s32.totalorder %s27, 1
      %p113 = scmp.ne.s32.totalorder %s108, %s110
      %p114 = scmp.eq.s32.totalorder %s27, 0
      %p115 = por %p113, %p114
      %p116 = scmp.ne.s32.totalorder %s108, %s110
      %p117 = scmp.eq.s32.totalorder %s32, 1
      %p118 = por %p116, %p117
      %p119 = scmp.ne.s32.totalorder %s110, %s111
      %p120 = scmp.eq.s32.totalorder %s32, 0
      %p121 = por %p119, %p120
      %p122 = scmp.ne.s32.totalorder %s110, %s111
      %p123 = scmp.eq.s32.totalorder %s33, 1
      %p124 = por %p122, %p123
      %p126 = scmp.ne.s32.totalorder %s111, %s125
      %p127 = scmp.eq.s32.totalorder %s33, 0
      %p128 = por %p126, %p127
      %s130 = sadd.s32 %s129, 1
      %p133 = scmp.eq.s32.totalorder %s27, 1
      %p134 = scmp.ne.s32.totalorder %s129, %s131
      %p135 = scmp.eq.s32.totalorder %s27, 0
      %p136 = por %p134, %p135
      %p137 = scmp.ne.s32.totalorder %s129, %s131
      %p138 = scmp.eq.s32.totalorder %s32, 1
      %p139 = por %p137, %p138
      %p140 = scmp.ne.s32.totalorder %s131, %s132
      %p141 = scmp.eq.s32.totalorder %s32, 0
      %p142 = por %p140, %p141
      %p143 = scmp.ne.s32.totalorder %s131, %s132
      %p144 = scmp.eq.s32.totalorder %s33, 1
      %p145 = por %p143, %p144
      %p147 = scmp.ne.s32.totalorder %s132, %s146
      %p148 = scmp.eq.s32.totalorder %s33, 0
      %p149 = por %p147, %p148
      %s151 = sadd.s32 %s150, 1
      %p154 = scmp.eq.s32.totalorder %s27, 1
      %p155 = scmp.ne.s32.totalorder %s150, %s152
      %p156 = scmp.eq.s32.totalorder %s27, 0
      %p157 = por %p155, %p156
      %p158 = scmp.ne.s32.totalorder %s150, %s152
      %p159 = scmp.eq.s32.totalorder %s32, 1
      %p160 = por %p158, %p159
      %p161 = scmp.ne.s32.totalorder %s152, %s153
      %p162 = scmp.eq.s32.totalorder %s32, 0
      %p163 = por %p161, %p162
      %p164 = scmp.ne.s32.totalorder %s152, %s153
      %p165 = scmp.eq.s32.totalorder %s33, 1
      %p166 = por %p164, %p165
      %p168 = scmp.ne.s32.totalorder %s153, %s167
      %p169 = scmp.eq.s32.totalorder %s33, 0
      %p170 = por %p168, %p169
      %s172 = sadd.s32 %s171, 1
      %p175 = scmp.eq.s32.totalorder %s27, 1
      %p176 = scmp.ne.s32.totalorder %s171, %s173
      %p177 = scmp.eq.s32.totalorder %s27, 0
      %p178 = por %p176, %p177
      %p179 = scmp.ne.s32.totalorder %s171, %s173
      %p180 = scmp.eq.s32.totalorder %s32, 1
      %p181 = por %p179, %p180
      %p182 = scmp.ne.s32.totalorder %s173, %s174
      %p183 = scmp.eq.s32.totalorder %s32, 0
      %p184 = por %p182, %p183
      %p185 = scmp.ne.s32.totalorder %s173, %s174
      %p186 = scmp.eq.s32.totalorder %s33, 1
      %p187 = por %p185, %p186
      %p189 = scmp.ne.s32.totalorder %s174, %s188
      %p190 = scmp.eq.s32.totalorder %s33, 0
      %p191 = por %p189, %p190
      %s193 = sadd.s32 %s192, 1
      %p196 = scmp.eq.s32.totalorder %s27, 1
      %p197 = scmp.ne.s32.totalorder %s192, %s194
      %p198 = scmp.eq.s32.totalorder %s27, 0
      %p199 = por %p197, %p198
      %p200 = scmp.ne.s32.totalorder %s192, %s194
      %p201 = scmp.eq.s32.totalorder %s32, 1
      %p202 = por %p200, %p201
      %p203 = scmp.ne.s32.totalorder %s194, %s195
      %p204 = scmp.eq.s32.totalorder %s32, 0
      %p205 = por %p203, %p204
      %p206 = scmp.ne.s32.totalorder %s194, %s195
      %p207 = scmp.eq.s32.totalorder %s33, 1
      %p208 = por %p206, %p207
      %p210 = scmp.ne.s32.totalorder %s195, %s209
      %p211 = scmp.eq.s32.totalorder %s33, 0
      %p212 = por %p210, %p211
      %s214 = sadd.s32 %s213, 1
      %p217 = scmp.eq.s32.totalorder %s27, 1
      %p218 = scmp.ne.s32.totalorder %s213, %s215
      %p219 = scmp.eq.s32.totalorder %s27, 0
      %p220 = por %p218, %p219
      %p221 = scmp.ne.s32.totalorder %s213, %s215
      %p222 = scmp.eq.s32.totalorder %s32, 1
      %p223 = por %p221, %p222
      %p224 = scmp.ne.s32.totalorder %s215, %s216
      %p225 = scmp.eq.s32.totalorder %s32, 0
      %p226 = por %p224, %p225
      %p227 = scmp.ne.s32.totalorder %s215, %s216
      %p228 = scmp.eq.s32.totalorder %s33, 1
      %p229 = por %p227, %p228
      %p231 = scmp.ne.s32.totalorder %s216, %s230
      %p232 = scmp.eq.s32.totalorder %s33, 0
      %p233 = por %p231, %p232
      %s235 = sadd.s32 %s234, 1
      %p238 = scmp.eq.s32.totalorder %s27, 1
      %p239 = scmp.ne.s32.totalorder %s234, %s236
      %p240 = scmp.eq.s32.totalorder %s27, 0
      %p241 = por %p239, %p240
      %p242 = scmp.ne.s32.totalorder %s234, %s236
      %p243 = scmp.eq.s32.totalorder %s32, 1
      %p244 = por %p242, %p243
      %p245 = scmp.ne.s32.totalorder %s236, %s237
      %p246 = scmp.eq.s32.totalorder %s32, 0
      %p247 = por %p245, %p246
      %p248 = scmp.ne.s32.totalorder %s236, %s237
      %p249 = scmp.eq.s32.totalorder %s33, 1
      %p250 = por %p248, %p249
      %p252 = scmp.ne.s32.totalorder %s237, %s251
      %p253 = scmp.eq.s32.totalorder %s33, 0
      %p254 = por %p252, %p253
      %s256 = sadd.s32 %s255, 1
      %p259 = scmp.eq.s32.totalorder %s27, 1
      %p260 = scmp.ne.s32.totalorder %s255, %s257
      %p261 = scmp.eq.s32.totalorder %s27, 0
      %p262 = por %p260, %p261
      %p263 = scmp.ne.s32.totalorder %s255, %s257
      %p264 = scmp.eq.s32.totalorder %s32, 1
      %p265 = por %p263, %p264
      %p266 = scmp.ne.s32.totalorder %s257, %s258
      %p267 = scmp.eq.s32.totalorder %s32, 0
      %p268 = por %p266, %p267
      %p269 = scmp.ne.s32.totalorder %s257, %s258
      %p270 = scmp.eq.s32.totalorder %s33, 1
      %p271 = por %p269, %p270
      %p273 = scmp.ne.s32.totalorder %s258, %s272
      %p274 = scmp.eq.s32.totalorder %s33, 0
      %p275 = por %p273, %p274
      %s276 = ssub.s32 %s27, %s34
      %p277 = scmp.eq.s32.totalorder %s276, 0
      %s279 = sadd.s32 %s278, 1
      %s280 = scalar_select %p277, %s278, %s279
      %p283 = pneg %p277
      %p284 = scmp.eq.s32.totalorder %s27, 1
      %p285 = por %p283, %p284
      %p286 = scmp.ne.s32.totalorder %s278, %s281
      %p287 = scmp.eq.s32.totalorder %s27, 0
      %p288 = por %p286, %p287
      %p289 = scmp.ne.s32.totalorder %s278, %s281
      %p290 = scmp.eq.s32.totalorder %s32, 1
      %p291 = por %p289, %p290
      %p292 = scmp.ne.s32.totalorder %s281, %s282
      %p293 = scmp.eq.s32.totalorder %s32, 0
      %p294 = por %p292, %p293
      %p295 = scmp.ne.s32.totalorder %s281, %s282
      %p296 = scmp.eq.s32.totalorder %s33, 1
      %p297 = por %p295, %p296
      %p299 = scmp.ne.s32.totalorder %s282, %s298
      %p300 = scmp.eq.s32.totalorder %s33, 0
      %p301 = por %p299, %p300
      %p302 = scmp.le.s32.totalorder 1, %s27
      %p303 = scmp.lt.s32.totalorder %s27, 3
      %p304 = pnand %p302, %p303
      %p305 = pneg %p304
      // Predicated region
      $region9: #{tpu_custom_call.1} parent=5 // pred_check
        _
      $region10: #{tpu_custom_call.1} parent=5 // pred_check_branch
        %307 = sbr.rel (%p304) target = $region12
      $region11: #{tpu_custom_call.1} parent=5 // pred_region
        %s308 = ssub.s32 %s27, 1
        // Predicated region
        $region13: #{tpu_custom_call.1} parent=11 // pred_check
          %p309 = pneg %p100
        $region14: #{tpu_custom_call.1} parent=11 // pred_check_branch
          %311 = sbr.rel (%p309) target = $region16
        $region15: #{tpu_custom_call.1} parent=11 // pred_region
          _
        $region16: #{tpu_custom_call.1} parent=11 // pred_fallthru
          _
        // Predicated region
        $region17: #{tpu_custom_call.1} parent=11 // pred_check
          %p312 = pneg %p121
        $region18: #{tpu_custom_call.1} parent=11 // pred_check_branch
          %314 = sbr.rel (%p312) target = $region20
        $region19: #{tpu_custom_call.1} parent=11 // pred_region
          %s316 = ssub.s32 512, 512
          %317 = vsyncadd [#allocation7], %s316
          %s318 = sshll.u32 [#allocation6], 4
          %s319 = int_to_ptr.vmem [resolvable:$true] %s318
          %324 = dma.hbm_to_vmem [thread:$0]  %s3, 512, %s319, [#allocation7], 128, 128, 8
        $region20: #{tpu_custom_call.1} parent=11 // pred_fallthru
          _
        // Predicated region
        $region21: #{tpu_custom_call.1} parent=11 // pred_check
          %p325 = pneg %p142
        $region22: #{tpu_custom_call.1} parent=11 // pred_check_branch
          %327 = sbr.rel (%p325) target = $region24
        $region23: #{tpu_custom_call.1} parent=11 // pred_region
          %s329 = ssub.s32 512, 512
          %330 = vsyncadd [#allocation7], %s329
          %s331 = sshll.u32 [#allocation8], 4
          %s332 = int_to_ptr.vmem [resolvable:$true] %s331
          %337 = dma.hbm_to_vmem [thread:$0]  %s4, 512, %s332, [#allocation7], 128, 128, 8
        $region24: #{tpu_custom_call.1} parent=11 // pred_fallthru
          _
        // Predicated region
        $region25: #{tpu_custom_call.1} parent=11 // pred_check
          %p338 = pneg %p163
        $region26: #{tpu_custom_call.1} parent=11 // pred_check_branch
          %340 = sbr.rel (%p338) target = $region28
        $region27: #{tpu_custom_call.1} parent=11 // pred_region
          %s342 = ssub.s32 512, 512
          %343 = vsyncadd [#allocation10], %s342
          %s344 = sshll.u32 [#allocation9], 4
          %s345 = int_to_ptr.vmem [resolvable:$true] %s344
          %350 = dma.hbm_to_vmem [thread:$0]  %s5, 512, %s345, [#allocation10], 128, 128, 8
        $region28: #{tpu_custom_call.1} parent=11 // pred_fallthru
          _
        // Predicated region
        $region29: #{tpu_custom_call.1} parent=11 // pred_check
          %p351 = pneg %p184
        $region30: #{tpu_custom_call.1} parent=11 // pred_check_branch
          %353 = sbr.rel (%p351) target = $region32
        $region31: #{tpu_custom_call.1} parent=11 // pred_region
          _
        $region32: #{tpu_custom_call.1} parent=11 // pred_fallthru
          _
        // Predicated region
        $region33: #{tpu_custom_call.1} parent=11 // pred_check
          %p354 = pneg %p205
        $region34: #{tpu_custom_call.1} parent=11 // pred_check_branch
          %356 = sbr.rel (%p354) target = $region36
        $region35: #{tpu_custom_call.1} parent=11 // pred_region
          _
        $region36: #{tpu_custom_call.1} parent=11 // pred_fallthru
          _
        // Predicated region
        $region37: #{tpu_custom_call.1} parent=11 // pred_check
          %p357 = pneg %p226
        $region38: #{tpu_custom_call.1} parent=11 // pred_check_branch
          %359 = sbr.rel (%p357) target = $region40
        $region39: #{tpu_custom_call.1} parent=11 // pred_region
          _
        $region40: #{tpu_custom_call.1} parent=11 // pred_fallthru
          _
        // Predicated region
        $region41: #{tpu_custom_call.1} parent=11 // pred_check
          %p360 = pneg %p247
        $region42: #{tpu_custom_call.1} parent=11 // pred_check_branch
          %362 = sbr.rel (%p360) target = $region44
        $region43: #{tpu_custom_call.1} parent=11 // pred_region
          _
        $region44: #{tpu_custom_call.1} parent=11 // pred_fallthru
          _
        // Predicated region
        $region45: #{tpu_custom_call.1} parent=11 // pred_check
          %p363 = pneg %p268
        $region46: #{tpu_custom_call.1} parent=11 // pred_check_branch
          %365 = sbr.rel (%p363) target = $region48
        $region47: #{tpu_custom_call.1} parent=11 // pred_region
          _
        $region48: #{tpu_custom_call.1} parent=11 // pred_fallthru
          _
      $region12: #{tpu_custom_call.1} parent=5 // pred_fallthru
        _
      %p366 = scmp.lt.s32.totalorder %s27, 2
      // Predicated region
      $region49: #{tpu_custom_call.1} parent=5 // pred_check
        %p367 = pneg %p366
      $region50: #{tpu_custom_call.1} parent=5 // pred_check_branch
        %369 = sbr.rel (%p367) target = $region52
      $region51: #{tpu_custom_call.1} parent=5 // pred_region
        // Predicated region
        $region53: #{tpu_custom_call.1} parent=51 // pred_check
          %p370 = pneg %p47
        $region54: #{tpu_custom_call.1} parent=51 // pred_check_branch
          %372 = sbr.rel (%p370) target = $region56
        $region55: #{tpu_custom_call.1} parent=51 // pred_region
          %s373 = smul.u32 8, %s27
          %p374 = scmp.lt.s32.totalorder %s373, 15
          %s375 = scalar_select %p374, %s373, 15
          %s376 = scalar_lea.vmem %s0, %s375
          %s377 = smul.u32 8, %s27
        $region56: #{tpu_custom_call.1} parent=51 // pred_fallthru
          _
        // Predicated region
        $region57: #{tpu_custom_call.1} parent=51 // pred_check
          %p378 = pneg %p73
        $region58: #{tpu_custom_call.1} parent=51 // pred_check_branch
          %380 = sbr.rel (%p378) target = $region60
        $region59: #{tpu_custom_call.1} parent=51 // pred_region
          %s381 = sand.u32 %s63, 1
          %s382 = scalar_lea.sflag [#allocation4], %s381
          %s383 = sand.u32 %s63, 1
          %s384 = smul.addr %s383, 8
          %s385 = scalar_lea.vmem [#allocation3], %s384
          %s386 = smul.u32 8, %s27
          %s388 = ssub.s32 128, 128
          %389 = vsyncadd %s382, %s388
          %s390 = smul.addr %s386, 16
          %s391 = scalar_lea.hbm %s1, %s390
          %s393 = sshll.u32 %s385, 4
          %s394 = int_to_ptr.vmem [resolvable:$true] %s393
          %396 = dma.hbm_to_vmem [thread:$0]  %s391, 128, %s394, %s382
        $region60: #{tpu_custom_call.1} parent=51 // pred_fallthru
          _
      $region52: #{tpu_custom_call.1} parent=5 // pred_fallthru
        _
      %p397 = scmp.le.s32.totalorder 1, %s27
      %p398 = scmp.lt.s32.totalorder %s27, 3
      %p399 = pnand %p397, %p398
      %p400 = pneg %p399
      // Predicated region
      $region61: #{tpu_custom_call.1} parent=5 // pred_check
        _
      $region62: #{tpu_custom_call.1} parent=5 // pred_check_branch
        %402 = sbr.rel (%p399) target = $region64
      $region63: #{tpu_custom_call.1} parent=5 // pred_region
        %s403 = ssub.s32 %s27, 1
        %s404 = sand.u32 %s66, 1
        %s405 = scalar_lea.sflag [#allocation4], %s404
        %s406 = sand.u32 %s66, 1
        %s407 = smul.addr %s406, 8
        %s408 = scalar_lea.vmem [#allocation3], %s407
        // Predicated region
        $region65: #{tpu_custom_call.1} parent=63 // pred_check
          %p409 = pneg %p79
        $region66: #{tpu_custom_call.1} parent=63 // pred_check_branch
          %411 = sbr.rel (%p409) target = $region68
        $region67: #{tpu_custom_call.1} parent=63 // pred_region
          %412 = dma.done %s405, 128
        $region68: #{tpu_custom_call.1} parent=63 // pred_fallthru
          _
        // Predicated region
        $region69: #{tpu_custom_call.1} parent=63 // pred_check
          %p413 = pneg %p121
        $region70: #{tpu_custom_call.1} parent=63 // pred_check_branch
          %415 = sbr.rel (%p413) target = $region72
        $region71: #{tpu_custom_call.1} parent=63 // pred_region
          %416 = dma.done [#allocation7], 512
        $region72: #{tpu_custom_call.1} parent=63 // pred_fallthru
          _
        // Predicated region
        $region73: #{tpu_custom_call.1} parent=63 // pred_check
          %p417 = pneg %p142
        $region74: #{tpu_custom_call.1} parent=63 // pred_check_branch
          %419 = sbr.rel (%p417) target = $region76
        $region75: #{tpu_custom_call.1} parent=63 // pred_region
          %420 = dma.done [#allocation7], 512
        $region76: #{tpu_custom_call.1} parent=63 // pred_fallthru
          _
        // Predicated region
        $region77: #{tpu_custom_call.1} parent=63 // pred_check
          %p421 = pneg %p163
        $region78: #{tpu_custom_call.1} parent=63 // pred_check_branch
          %423 = sbr.rel (%p421) target = $region80
        $region79: #{tpu_custom_call.1} parent=63 // pred_region
          %424 = dma.done [#allocation10], 512
        $region80: #{tpu_custom_call.1} parent=63 // pred_fallthru
          _
        %s425 = smul.u32 8, %s32
        %p426 = scmp.lt.s32.totalorder %s425, 15
        %s427 = scalar_select %p426, %s425, 15
        %s428 = scalar_lea.vmem %s0, %s427
        %p429 = pneg %p53
        %p430 = pneg %p50
        %s431 = sand.u32 %s66, 1
        %s432 = scalar_lea.sflag [#allocation4], %s431
        %s433 = sand.u32 %s66, 1
        %s434 = smul.addr %s433, 8
        %s435 = scalar_lea.vmem [#allocation3], %s434
        %p436 = pneg %p79
        %p437 = pneg %p76
        %p438 = pneg %p100
        %p439 = pneg %p97
        %p440 = pneg %p121
        %p441 = pneg %p118
        %p442 = pneg %p142
        %p443 = pneg %p139
        %p444 = pneg %p163
        %p445 = pneg %p160
        %p446 = pneg %p184
        %p447 = pneg %p181
        %p448 = pneg %p205
        %p449 = pneg %p202
        %p450 = pneg %p226
        %p451 = pneg %p223
        %p452 = pneg %p247
        %p453 = pneg %p244
        %p454 = pneg %p268
        %p455 = pneg %p265
        %p456 = pneg %p294
        %p457 = pneg %p291
        %s458 = sand.u32 %s281, 1
        %s459 = scalar_lea.sflag [#allocation5], %s458
        %s460 = sand.u32 %s281, 1
        %s461 = scalar_lea.vmem [#allocation11], %s460
        %s462 = smul.u32 8, %s32
        %p463 = scmp.lt.s32.totalorder %s462, 15
        %s464 = scalar_select %p463, %s462, 15
        %s465 = scalar_lea.vmem %s0, %s464
        %s466 = smul.u32 8, %s32
        %s467 = smul.u32 8, %s32
        %v468 = vlaneseq
        %v469 = vshrl.u32 %v468, 7
        %v470 = vadd.s32 %v469, 8
        %v471 = vadd.s32 %v469, 16
        %v472 = vadd.s32 %v469, 24
        %v473 = vadd.s32 %v469, 32
        %v474 = vadd.s32 %v469, 40
        %v475 = vadd.s32 %v469, 48
        %v476 = vadd.s32 %v469, 56
        %v477 = vld [vmem:[%s465] sm:$0xff]
        %v478 = vlaneseq
        %v479 = vshrl.u32 %v478, 7
        %v480 = vsub.s32 0, %v479
        %v481 = vrot.slane %v477, %v480
        %v482 = vlaneseq
        %v483 = vshrl.u32 %v482, 7
        %v484 = vsub.s32 1, %v483
        %v485 = vrot.slane %v477, %v484
        %v486 = vlaneseq
        %v487 = vshrl.u32 %v486, 7
        %v488 = vsub.s32 2, %v487
        %v489 = vrot.slane %v477, %v488
        %v490 = vlaneseq
        %v491 = vshrl.u32 %v490, 7
        %v492 = vsub.s32 3, %v491
        %v493 = vrot.slane %v477, %v492
        %v494 = vlaneseq
        %v495 = vshrl.u32 %v494, 7
        %v496 = vsub.s32 4, %v495
        %v497 = vrot.slane %v477, %v496
        %v498 = vlaneseq
        %v499 = vshrl.u32 %v498, 7
        %v500 = vsub.s32 5, %v499
        %v501 = vrot.slane %v477, %v500
        %v502 = vlaneseq
        %v503 = vshrl.u32 %v502, 7
        %v504 = vsub.s32 6, %v503
        %v505 = vrot.slane %v477, %v504
        %v506 = vlaneseq
        %v507 = vshrl.u32 %v506, 7
        %v508 = vsub.s32 7, %v507
        %v509 = vrot.slane %v477, %v508
        %vm510 = vcmp.eq.s32.totalorder %v481, %v469
        %vm511 = vcmp.eq.s32.totalorder %v485, %v469
        %vm512 = vcmp.eq.s32.totalorder %v489, %v469
        %vm513 = vcmp.eq.s32.totalorder %v493, %v469
        %vm514 = vcmp.eq.s32.totalorder %v497, %v469
        %vm515 = vcmp.eq.s32.totalorder %v501, %v469
        %vm516 = vcmp.eq.s32.totalorder %v505, %v469
        %vm517 = vcmp.eq.s32.totalorder %v509, %v469
        %vm518 = vcmp.eq.s32.totalorder %v481, %v470
        %vm519 = vcmp.eq.s32.totalorder %v485, %v470
        %vm520 = vcmp.eq.s32.totalorder %v489, %v470
        %vm521 = vcmp.eq.s32.totalorder %v493, %v470
        %vm522 = vcmp.eq.s32.totalorder %v497, %v470
        %vm523 = vcmp.eq.s32.totalorder %v501, %v470
        %vm524 = vcmp.eq.s32.totalorder %v505, %v470
        %vm525 = vcmp.eq.s32.totalorder %v509, %v470
        %vm526 = vcmp.eq.s32.totalorder %v481, %v471
        %vm527 = vcmp.eq.s32.totalorder %v485, %v471
        %vm528 = vcmp.eq.s32.totalorder %v489, %v471
        %vm529 = vcmp.eq.s32.totalorder %v493, %v471
        %vm530 = vcmp.eq.s32.totalorder %v497, %v471
        %vm531 = vcmp.eq.s32.totalorder %v501, %v471
        %vm532 = vcmp.eq.s32.totalorder %v505, %v471
        %vm533 = vcmp.eq.s32.totalorder %v509, %v471
        %vm534 = vcmp.eq.s32.totalorder %v481, %v472
        %vm535 = vcmp.eq.s32.totalorder %v485, %v472
        %vm536 = vcmp.eq.s32.totalorder %v489, %v472
        %vm537 = vcmp.eq.s32.totalorder %v493, %v472
        %vm538 = vcmp.eq.s32.totalorder %v497, %v472
        %vm539 = vcmp.eq.s32.totalorder %v501, %v472
        %vm540 = vcmp.eq.s32.totalorder %v505, %v472
        %vm541 = vcmp.eq.s32.totalorder %v509, %v472
        %vm542 = vcmp.eq.s32.totalorder %v481, %v473
        %vm543 = vcmp.eq.s32.totalorder %v485, %v473
        %vm544 = vcmp.eq.s32.totalorder %v489, %v473
        %vm545 = vcmp.eq.s32.totalorder %v493, %v473
        %vm546 = vcmp.eq.s32.totalorder %v497, %v473
        %vm547 = vcmp.eq.s32.totalorder %v501, %v473
        %vm548 = vcmp.eq.s32.totalorder %v505, %v473
        %vm549 = vcmp.eq.s32.totalorder %v509, %v473
        %vm550 = vcmp.eq.s32.totalorder %v481, %v474
        %vm551 = vcmp.eq.s32.totalorder %v485, %v474
        %vm552 = vcmp.eq.s32.totalorder %v489, %v474
        %vm553 = vcmp.eq.s32.totalorder %v493, %v474
        %vm554 = vcmp.eq.s32.totalorder %v497, %v474
        %vm555 = vcmp.eq.s32.totalorder %v501, %v474
        %vm556 = vcmp.eq.s32.totalorder %v505, %v474
        %vm557 = vcmp.eq.s32.totalorder %v509, %v474
        %vm558 = vcmp.eq.s32.totalorder %v481, %v475
        %vm559 = vcmp.eq.s32.totalorder %v485, %v475
        %vm560 = vcmp.eq.s32.totalorder %v489, %v475
        %vm561 = vcmp.eq.s32.totalorder %v493, %v475
        %vm562 = vcmp.eq.s32.totalorder %v497, %v475
        %vm563 = vcmp.eq.s32.totalorder %v501, %v475
        %vm564 = vcmp.eq.s32.totalorder %v505, %v475
        %vm565 = vcmp.eq.s32.totalorder %v509, %v475
        %vm566 = vcmp.eq.s32.totalorder %v481, %v476
        %vm567 = vcmp.eq.s32.totalorder %v485, %v476
        %vm568 = vcmp.eq.s32.totalorder %v489, %v476
        %vm569 = vcmp.eq.s32.totalorder %v493, %v476
        %vm570 = vcmp.eq.s32.totalorder %v497, %v476
        %vm571 = vcmp.eq.s32.totalorder %v501, %v476
        %vm572 = vcmp.eq.s32.totalorder %v505, %v476
        %vm573 = vcmp.eq.s32.totalorder %v509, %v476
        %v574 = vsel %vm510, 1, 0
        %v575 = vsel %vm511, 1, 0
        %v576 = vsel %vm512, 1, 0
        %v577 = vsel %vm513, 1, 0
        %v578 = vsel %vm514, 1, 0
        %v579 = vsel %vm515, 1, 0
        %v580 = vsel %vm516, 1, 0
        %v581 = vsel %vm517, 1, 0
        %v582 = vsel %vm518, 1, 0
        %v583 = vsel %vm519, 1, 0
        %v584 = vsel %vm520, 1, 0
        %v585 = vsel %vm521, 1, 0
        %v586 = vsel %vm522, 1, 0
        %v587 = vsel %vm523, 1, 0
        %v588 = vsel %vm524, 1, 0
        %v589 = vsel %vm525, 1, 0
        %v590 = vsel %vm526, 1, 0
        %v591 = vsel %vm527, 1, 0
        %v592 = vsel %vm528, 1, 0
        %v593 = vsel %vm529, 1, 0
        %v594 = vsel %vm530, 1, 0
        %v595 = vsel %vm531, 1, 0
        %v596 = vsel %vm532, 1, 0
        %v597 = vsel %vm533, 1, 0
        %v598 = vsel %vm534, 1, 0
        %v599 = vsel %vm535, 1, 0
        %v600 = vsel %vm536, 1, 0
        %v601 = vsel %vm537, 1, 0
        %v602 = vsel %vm538, 1, 0
        %v603 = vsel %vm539, 1, 0
        %v604 = vsel %vm540, 1, 0
        %v605 = vsel %vm541, 1, 0
        %v606 = vsel %vm542, 1, 0
        %v607 = vsel %vm543, 1, 0
        %v608 = vsel %vm544, 1, 0
        %v609 = vsel %vm545, 1, 0
        %v610 = vsel %vm546, 1, 0
        %v611 = vsel %vm547, 1, 0
        %v612 = vsel %vm548, 1, 0
        %v613 = vsel %vm549, 1, 0
        %v614 = vsel %vm550, 1, 0
        %v615 = vsel %vm551, 1, 0
        %v616 = vsel %vm552, 1, 0
        %v617 = vsel %vm553, 1, 0
        %v618 = vsel %vm554, 1, 0
        %v619 = vsel %vm555, 1, 0
        %v620 = vsel %vm556, 1, 0
        %v621 = vsel %vm557, 1, 0
        %v622 = vsel %vm558, 1, 0
        %v623 = vsel %vm559, 1, 0
        %v624 = vsel %vm560, 1, 0
        %v625 = vsel %vm561, 1, 0
        %v626 = vsel %vm562, 1, 0
        %v627 = vsel %vm563, 1, 0
        %v628 = vsel %vm564, 1, 0
        %v629 = vsel %vm565, 1, 0
        %v630 = vsel %vm566, 1, 0
        %v631 = vsel %vm567, 1, 0
        %v632 = vsel %vm568, 1, 0
        %v633 = vsel %vm569, 1, 0
        %v634 = vsel %vm570, 1, 0
        %v635 = vsel %vm571, 1, 0
        %v636 = vsel %vm572, 1, 0
        %v637 = vsel %vm573, 1, 0
        %v638 = vcvt.s32.f32 %v574
        %v639 = vcvt.s32.f32 %v575
        %v640 = vcvt.s32.f32 %v576
        %v641 = vcvt.s32.f32 %v577
        %v642 = vcvt.s32.f32 %v578
        %v643 = vcvt.s32.f32 %v579
        %v644 = vcvt.s32.f32 %v580
        %v645 = vcvt.s32.f32 %v581
        %v646 = vcvt.s32.f32 %v582
        %v647 = vcvt.s32.f32 %v583
        %v648 = vcvt.s32.f32 %v584
        %v649 = vcvt.s32.f32 %v585
        %v650 = vcvt.s32.f32 %v586
        %v651 = vcvt.s32.f32 %v587
        %v652 = vcvt.s32.f32 %v588
        %v653 = vcvt.s32.f32 %v589
        %v654 = vcvt.s32.f32 %v590
        %v655 = vcvt.s32.f32 %v591
        %v656 = vcvt.s32.f32 %v592
        %v657 = vcvt.s32.f32 %v593
        %v658 = vcvt.s32.f32 %v594
        %v659 = vcvt.s32.f32 %v595
        %v660 = vcvt.s32.f32 %v596
        %v661 = vcvt.s32.f32 %v597
        %v662 = vcvt.s32.f32 %v598
        %v663 = vcvt.s32.f32 %v599
        %v664 = vcvt.s32.f32 %v600
        %v665 = vcvt.s32.f32 %v601
        %v666 = vcvt.s32.f32 %v602
        %v667 = vcvt.s32.f32 %v603
        %v668 = vcvt.s32.f32 %v604
        %v669 = vcvt.s32.f32 %v605
        %v670 = vcvt.s32.f32 %v606
        %v671 = vcvt.s32.f32 %v607
        %v672 = vcvt.s32.f32 %v608
        %v673 = vcvt.s32.f32 %v609
        %v674 = vcvt.s32.f32 %v610
        %v675 = vcvt.s32.f32 %v611
        %v676 = vcvt.s32.f32 %v612
        %v677 = vcvt.s32.f32 %v613
        %v678 = vcvt.s32.f32 %v614
        %v679 = vcvt.s32.f32 %v615
        %v680 = vcvt.s32.f32 %v616
        %v681 = vcvt.s32.f32 %v617
        %v682 = vcvt.s32.f32 %v618
        %v683 = vcvt.s32.f32 %v619
        %v684 = vcvt.s32.f32 %v620
        %v685 = vcvt.s32.f32 %v621
        %v686 = vcvt.s32.f32 %v622
        %v687 = vcvt.s32.f32 %v623
        %v688 = vcvt.s32.f32 %v624
        %v689 = vcvt.s32.f32 %v625
        %v690 = vcvt.s32.f32 %v626
        %v691 = vcvt.s32.f32 %v627
        %v692 = vcvt.s32.f32 %v628
        %v693 = vcvt.s32.f32 %v629
        %v694 = vcvt.s32.f32 %v630
        %v695 = vcvt.s32.f32 %v631
        %v696 = vcvt.s32.f32 %v632
        %v697 = vcvt.s32.f32 %v633
        %v698 = vcvt.s32.f32 %v634
        %v699 = vcvt.s32.f32 %v635
        %v700 = vcvt.s32.f32 %v636
        %v701 = vcvt.s32.f32 %v637
        %v702 = vld [vmem:[%s2] sm:$0xff]
        %v703 = vld [vmem:[%s2 + $0x8] sm:$0xff]
        %v704 = vld [vmem:[%s2 + $0x10] sm:$0xff]
        %v705 = vld [vmem:[%s2 + $0x18] sm:$0xff]
        %vm706 = vcmask 523264
        %v708 = vsel %vm706, %v702, 0
        %v711 = vsel %vm706, %v703, 0
        %v714 = vsel %vm706, %v704, 0
        %v717 = vsel %vm706, %v705, 0
        %719 = vmatprep.subr.mxu0 0.0
        %720 = vmatpush1.msra.mxu0 0.0
        %721 = vmatprep.subr.mxu0 0.0
        %722 = vmatpush1.msra.mxu0 0.0
        %723 = vmatprep.subr.mxu0 0.0
        %724 = vmatpush1.msra.mxu0 0.0
        %725 = vmatprep.subr.mxu0 0.0
        %726 = vmatpush1.msra.mxu0 0.0
        %727 = vmatprep.subr.mxu0 0.0
        %728 = vmatpush1.msra.mxu0 0.0
        %729 = vmatprep.subr.mxu0 0.0
        %730 = vmatpush1.msra.mxu0 0.0
        %731 = vmatprep.subr.mxu0 0.0
        %732 = vmatpush1.msra.mxu0 0.0
        %733 = vmatprep.subr.mxu0 0.0
        %734 = vmatpush1.msra.mxu0 0.0
        %735 = vmatprep.subr.mxu0 %v695
        %736 = vmatpush1.msra.mxu0 %v694
        %737 = vmatprep.subr.mxu0 %v687
        %738 = vmatpush1.msra.mxu0 %v686
        %739 = vmatprep.subr.mxu0 %v679
        %740 = vmatpush1.msra.mxu0 %v678
        %741 = vmatprep.subr.mxu0 %v671
        %742 = vmatpush1.msra.mxu0 %v670
        %743 = vmatprep.subr.mxu0 %v663
        %744 = vmatpush1.msra.mxu0 %v662
        %745 = vmatprep.subr.mxu0 %v655
        %746 = vmatpush1.msra.mxu0 %v654
        %747 = vmatprep.subr.mxu0 %v647
        %748 = vmatpush1.msra.mxu0 %v646
        %749 = vmatprep.subr.mxu0 %v639
        %750 = vmatpush1.msra.mxu0 %v638
        %751 = vmatprep.subr.mxu0 0.0
        %752 = vmatpush2.msra.mxu0 0.0
        %753 = vmatprep.subr.mxu0 0.0
        %754 = vmatpush2.msra.mxu0 0.0
        %755 = vmatprep.subr.mxu0 0.0
        %756 = vmatpush2.msra.mxu0 0.0
        %757 = vmatprep.subr.mxu0 0.0
        %758 = vmatpush2.msra.mxu0 0.0
        %759 = vmatprep.subr.mxu0 0.0
        %760 = vmatpush2.msra.mxu0 0.0
        %761 = vmatprep.subr.mxu0 0.0
        %762 = vmatpush2.msra.mxu0 0.0
        %763 = vmatprep.subr.mxu0 0.0
        %764 = vmatpush2.msra.mxu0 0.0
        %765 = vmatprep.subr.mxu0 0.0
        %766 = vmatpush2.msra.mxu0 0.0
        %767 = vmatprep.subr.mxu0 0.0
        %768 = vmatpush2.msra.mxu0 0.0
        %769 = vmatprep.subr.mxu0 0.0
        %770 = vmatpush2.msra.mxu0 0.0
        %771 = vmatprep.subr.mxu0 0.0
        %772 = vmatpush2.msra.mxu0 0.0
        %773 = vmatprep.subr.mxu0 0.0
        %774 = vmatpush2.msra.mxu0 0.0
        %775 = vmatprep.subr.mxu0 0.0
        %776 = vmatpush2.msra.mxu0 0.0
        %777 = vmatprep.subr.mxu0 0.0
        %778 = vmatpush2.msra.mxu0 0.0
        %779 = vmatprep.subr.mxu0 0.0
        %780 = vmatpush2.msra.mxu0 0.0
        %781 = vmatprep.subr.mxu0 0.0
        %782 = vmatpush2.msra.mxu0 0.0
        %783 = vmatprep.mubr.f32.mxu0 0.0
        %784 = vmatmul.mubr.f32.gmra.mxu0 %v708
        %v785 = vpop.f32.mrf.mxu0
        %v786 = vadd.f32 0.0, %v785
        %v787 = vpop.f32.mrf.mxu0
        %v788 = vadd.f32 0.0, %v787
        %789 = vmatprep.mubr.f32.mxu0 0.0
        %790 = vmatmul.mubr.f32.gmra.mxu0 %v711
        %v791 = vpop.f32.mrf.mxu0
        %v792 = vadd.f32 0.0, %v791
        %v793 = vpop.f32.mrf.mxu0
        %v794 = vadd.f32 0.0, %v793
        %795 = vmatprep.mubr.f32.mxu0 0.0
        %796 = vmatmul.mubr.f32.gmra.mxu0 %v714
        %v797 = vpop.f32.mrf.mxu0
        %v798 = vadd.f32 0.0, %v797
        %v799 = vpop.f32.mrf.mxu0
        %v800 = vadd.f32 0.0, %v799
        %801 = vmatprep.mubr.f32.mxu0 0.0
        %802 = vmatmul.mubr.f32.gmra.mxu0 %v717
        %v803 = vpop.f32.mrf.mxu0
        %v804 = vadd.f32 0.0, %v803
        %v805 = vpop.f32.mrf.mxu0
        %v806 = vadd.f32 0.0, %v805
        %807 = vdwg.mxu0
        %808 = vmatprep.subr.mxu0 0.0
        %809 = vmatpush1.msra.mxu0 0.0
        %810 = vmatprep.subr.mxu0 0.0
        %811 = vmatpush1.msra.mxu0 0.0
        %812 = vmatprep.subr.mxu0 0.0
        %813 = vmatpush1.msra.mxu0 0.0
        %814 = vmatprep.subr.mxu0 0.0
        %815 = vmatpush1.msra.mxu0 0.0
        %816 = vmatprep.subr.mxu0 0.0
        %817 = vmatpush1.msra.mxu0 0.0
        %818 = vmatprep.subr.mxu0 0.0
        %819 = vmatpush1.msra.mxu0 0.0
        %820 = vmatprep.subr.mxu0 0.0
        %821 = vmatpush1.msra.mxu0 0.0
        %822 = vmatprep.subr.mxu0 0.0
        %823 = vmatpush1.msra.mxu0 0.0
        %824 = vmatprep.subr.mxu0 %v697
        %825 = vmatpush1.msra.mxu0 %v696
        %826 = vmatprep.subr.mxu0 %v689
        %827 = vmatpush1.msra.mxu0 %v688
        %828 = vmatprep.subr.mxu0 %v681
        %829 = vmatpush1.msra.mxu0 %v680
        %830 = vmatprep.subr.mxu0 %v673
        %831 = vmatpush1.msra.mxu0 %v672
        %832 = vmatprep.subr.mxu0 %v665
        %833 = vmatpush1.msra.mxu0 %v664
        %834 = vmatprep.subr.mxu0 %v657
        %835 = vmatpush1.msra.mxu0 %v656
        %836 = vmatprep.subr.mxu0 %v649
        %837 = vmatpush1.msra.mxu0 %v648
        %838 = vmatprep.subr.mxu0 %v641
        %839 = vmatpush1.msra.mxu0 %v640
        %840 = vmatprep.subr.mxu0 0.0
        %841 = vmatpush2.msra.mxu0 0.0
        %842 = vmatprep.subr.mxu0 0.0
        %843 = vmatpush2.msra.mxu0 0.0
        %844 = vmatprep.subr.mxu0 0.0
        %845 = vmatpush2.msra.mxu0 0.0
        %846 = vmatprep.subr.mxu0 0.0
        %847 = vmatpush2.msra.mxu0 0.0
        %848 = vmatprep.subr.mxu0 0.0
        %849 = vmatpush2.msra.mxu0 0.0
        %850 = vmatprep.subr.mxu0 0.0
        %851 = vmatpush2.msra.mxu0 0.0
        %852 = vmatprep.subr.mxu0 0.0
        %853 = vmatpush2.msra.mxu0 0.0
        %854 = vmatprep.subr.mxu0 0.0
        %855 = vmatpush2.msra.mxu0 0.0
        %856 = vmatprep.subr.mxu0 0.0
        %857 = vmatpush2.msra.mxu0 0.0
        %858 = vmatprep.subr.mxu0 0.0
        %859 = vmatpush2.msra.mxu0 0.0
        %860 = vmatprep.subr.mxu0 0.0
        %861 = vmatpush2.msra.mxu0 0.0
        %862 = vmatprep.subr.mxu0 0.0
        %863 = vmatpush2.msra.mxu0 0.0
        %864 = vmatprep.subr.mxu0 0.0
        %865 = vmatpush2.msra.mxu0 0.0
        %866 = vmatprep.subr.mxu0 0.0
        %867 = vmatpush2.msra.mxu0 0.0
        %868 = vmatprep.subr.mxu0 0.0
        %869 = vmatpush2.msra.mxu0 0.0
        %870 = vmatprep.subr.mxu0 0.0
        %871 = vmatpush2.msra.mxu0 0.0
        %872 = vmatprep.mubr.f32.mxu0 0.0
        %873 = vmatmul.mubr.f32.gmra.mxu0 %v708
        %v874 = vpop.f32.mrf.mxu0
        %v875 = vadd.f32 0.0, %v874
        %v876 = vpop.f32.mrf.mxu0
        %v877 = vadd.f32 0.0, %v876
        %878 = vmatprep.mubr.f32.mxu0 0.0
        %879 = vmatmul.mubr.f32.gmra.mxu0 %v711
        %v880 = vpop.f32.mrf.mxu0
        %v881 = vadd.f32 0.0, %v880
        %v882 = vpop.f32.mrf.mxu0
        %v883 = vadd.f32 0.0, %v882
        %884 = vmatprep.mubr.f32.mxu0 0.0
        %885 = vmatmul.mubr.f32.gmra.mxu0 %v714
        %v886 = vpop.f32.mrf.mxu0
        %v887 = vadd.f32 0.0, %v886
        %v888 = vpop.f32.mrf.mxu0
        %v889 = vadd.f32 0.0, %v888
        %890 = vmatprep.mubr.f32.mxu0 0.0
        %891 = vmatmul.mubr.f32.gmra.mxu0 %v717
        %v892 = vpop.f32.mrf.mxu0
        %v893 = vadd.f32 0.0, %v892
        %v894 = vpop.f32.mrf.mxu0
        %v895 = vadd.f32 0.0, %v894
        %896 = vdwg.mxu0
        %897 = vmatprep.subr.mxu0 0.0
        %898 = vmatpush1.msra.mxu0 0.0
        %899 = vmatprep.subr.mxu0 0.0
        %900 = vmatpush1.msra.mxu0 0.0
        %901 = vmatprep.subr.mxu0 0.0
        %902 = vmatpush1.msra.mxu0 0.0
        %903 = vmatprep.subr.mxu0 0.0
        %904 = vmatpush1.msra.mxu0 0.0
        %905 = vmatprep.subr.mxu0 0.0
        %906 = vmatpush1.msra.mxu0 0.0
        %907 = vmatprep.subr.mxu0 0.0
        %908 = vmatpush1.msra.mxu0 0.0
        %909 = vmatprep.subr.mxu0 0.0
        %910 = vmatpush1.msra.mxu0 0.0
        %911 = vmatprep.subr.mxu0 0.0
        %912 = vmatpush1.msra.mxu0 0.0
        %913 = vmatprep.subr.mxu0 %v699
        %914 = vmatpush1.msra.mxu0 %v698
        %915 = vmatprep.subr.mxu0 %v691
        %916 = vmatpush1.msra.mxu0 %v690
        %917 = vmatprep.subr.mxu0 %v683
        %918 = vmatpush1.msra.mxu0 %v682
        %919 = vmatprep.subr.mxu0 %v675
        %920 = vmatpush1.msra.mxu0 %v674
        %921 = vmatprep.subr.mxu0 %v667
        %922 = vmatpush1.msra.mxu0 %v666
        %923 = vmatprep.subr.mxu0 %v659
        %924 = vmatpush1.msra.mxu0 %v658
        %925 = vmatprep.subr.mxu0 %v651
        %926 = vmatpush1.msra.mxu0 %v650
        %927 = vmatprep.subr.mxu0 %v643
        %928 = vmatpush1.msra.mxu0 %v642
        %929 = vmatprep.subr.mxu0 0.0
        %930 = vmatpush2.msra.mxu0 0.0
        %931 = vmatprep.subr.mxu0 0.0
        %932 = vmatpush2.msra.mxu0 0.0
        %933 = vmatprep.subr.mxu0 0.0
        %934 = vmatpush2.msra.mxu0 0.0
        %935 = vmatprep.subr.mxu0 0.0
        %936 = vmatpush2.msra.mxu0 0.0
        %937 = vmatprep.subr.mxu0 0.0
        %938 = vmatpush2.msra.mxu0 0.0
        %939 = vmatprep.subr.mxu0 0.0
        %940 = vmatpush2.msra.mxu0 0.0
        %941 = vmatprep.subr.mxu0 0.0
        %942 = vmatpush2.msra.mxu0 0.0
        %943 = vmatprep.subr.mxu0 0.0
        %944 = vmatpush2.msra.mxu0 0.0
        %945 = vmatprep.subr.mxu0 0.0
        %946 = vmatpush2.msra.mxu0 0.0
        %947 = vmatprep.subr.mxu0 0.0
        %948 = vmatpush2.msra.mxu0 0.0
        %949 = vmatprep.subr.mxu0 0.0
        %950 = vmatpush2.msra.mxu0 0.0
        %951 = vmatprep.subr.mxu0 0.0
        %952 = vmatpush2.msra.mxu0 0.0
        %953 = vmatprep.subr.mxu0 0.0
        %954 = vmatpush2.msra.mxu0 0.0
        %955 = vmatprep.subr.mxu0 0.0
        %956 = vmatpush2.msra.mxu0 0.0
        %957 = vmatprep.subr.mxu0 0.0
        %958 = vmatpush2.msra.mxu0 0.0
        %959 = vmatprep.subr.mxu0 0.0
        %960 = vmatpush2.msra.mxu0 0.0
        %961 = vmatprep.mubr.f32.mxu0 0.0
        %962 = vmatmul.mubr.f32.gmra.mxu0 %v708
        %v963 = vpop.f32.mrf.mxu0
        %v964 = vadd.f32 0.0, %v963
        %v965 = vpop.f32.mrf.mxu0
        %v966 = vadd.f32 0.0, %v965
        %967 = vmatprep.mubr.f32.mxu0 0.0
        %968 = vmatmul.mubr.f32.gmra.mxu0 %v711
        %v969 = vpop.f32.mrf.mxu0
        %v970 = vadd.f32 0.0, %v969
        %v971 = vpop.f32.mrf.mxu0
        %v972 = vadd.f32 0.0, %v971
        %973 = vmatprep.mubr.f32.mxu0 0.0
        %974 = vmatmul.mubr.f32.gmra.mxu0 %v714
        %v975 = vpop.f32.mrf.mxu0
        %v976 = vadd.f32 0.0, %v975
        %v977 = vpop.f32.mrf.mxu0
        %v978 = vadd.f32 0.0, %v977
        %979 = vmatprep.mubr.f32.mxu0 0.0
        %980 = vmatmul.mubr.f32.gmra.mxu0 %v717
        %v981 = vpop.f32.mrf.mxu0
        %v982 = vadd.f32 0.0, %v981
        %v983 = vpop.f32.mrf.mxu0
        %v984 = vadd.f32 0.0, %v983
        %985 = vdwg.mxu0
        %986 = vmatprep.subr.mxu0 0.0
        %987 = vmatpush1.msra.mxu0 0.0
        %988 = vmatprep.subr.mxu0 0.0
        %989 = vmatpush1.msra.mxu0 0.0
        %990 = vmatprep.subr.mxu0 0.0
        %991 = vmatpush1.msra.mxu0 0.0
        %992 = vmatprep.subr.mxu0 0.0
        %993 = vmatpush1.msra.mxu0 0.0
        %994 = vmatprep.subr.mxu0 0.0
        %995 = vmatpush1.msra.mxu0 0.0
        %996 = vmatprep.subr.mxu0 0.0
        %997 = vmatpush1.msra.mxu0 0.0
        %998 = vmatprep.subr.mxu0 0.0
        %999 = vmatpush1.msra.mxu0 0.0
        %1000 = vmatprep.subr.mxu0 0.0
        %1001 = vmatpush1.msra.mxu0 0.0
        %1002 = vmatprep.subr.mxu0 %v701
        %1003 = vmatpush1.msra.mxu0 %v700
        %1004 = vmatprep.subr.mxu0 %v693
        %1005 = vmatpush1.msra.mxu0 %v692
        %1006 = vmatprep.subr.mxu0 %v685
        %1007 = vmatpush1.msra.mxu0 %v684
        %1008 = vmatprep.subr.mxu0 %v677
        %1009 = vmatpush1.msra.mxu0 %v676
        %1010 = vmatprep.subr.mxu0 %v669
        %1011 = vmatpush1.msra.mxu0 %v668
        %1012 = vmatprep.subr.mxu0 %v661
        %1013 = vmatpush1.msra.mxu0 %v660
        %1014 = vmatprep.subr.mxu0 %v653
        %1015 = vmatpush1.msra.mxu0 %v652
        %1016 = vmatprep.subr.mxu0 %v645
        %1017 = vmatpush1.msra.mxu0 %v644
        %1018 = vmatprep.subr.mxu0 0.0
        %1019 = vmatpush2.msra.mxu0 0.0
        %1020 = vmatprep.subr.mxu0 0.0
        %1021 = vmatpush2.msra.mxu0 0.0
        %1022 = vmatprep.subr.mxu0 0.0
        %1023 = vmatpush2.msra.mxu0 0.0
        %1024 = vmatprep.subr.mxu0 0.0
        %1025 = vmatpush2.msra.mxu0 0.0
        %1026 = vmatprep.subr.mxu0 0.0
        %1027 = vmatpush2.msra.mxu0 0.0
        %1028 = vmatprep.subr.mxu0 0.0
        %1029 = vmatpush2.msra.mxu0 0.0
        %1030 = vmatprep.subr.mxu0 0.0
        %1031 = vmatpush2.msra.mxu0 0.0
        %1032 = vmatprep.subr.mxu0 0.0
        %1033 = vmatpush2.msra.mxu0 0.0
        %1034 = vmatprep.subr.mxu0 0.0
        %1035 = vmatpush2.msra.mxu0 0.0
        %1036 = vmatprep.subr.mxu0 0.0
        %1037 = vmatpush2.msra.mxu0 0.0
        %1038 = vmatprep.subr.mxu0 0.0
        %1039 = vmatpush2.msra.mxu0 0.0
        %1040 = vmatprep.subr.mxu0 0.0
        %1041 = vmatpush2.msra.mxu0 0.0
        %1042 = vmatprep.subr.mxu0 0.0
        %1043 = vmatpush2.msra.mxu0 0.0
        %1044 = vmatprep.subr.mxu0 0.0
        %1045 = vmatpush2.msra.mxu0 0.0
        %1046 = vmatprep.subr.mxu0 0.0
        %1047 = vmatpush2.msra.mxu0 0.0
        %1048 = vmatprep.subr.mxu0 0.0
        %1049 = vmatpush2.msra.mxu0 0.0
        %1050 = vmatprep.mubr.f32.mxu0 0.0
        %1051 = vmatmul.mubr.f32.gmra.mxu0 %v708
        %v1052 = vpop.f32.mrf.mxu0
        %v1053 = vadd.f32 0.0, %v1052
        %v1054 = vpop.f32.mrf.mxu0
        %v1055 = vadd.f32 0.0, %v1054
        %1056 = vmatprep.mubr.f32.mxu0 0.0
        %1057 = vmatmul.mubr.f32.gmra.mxu0 %v711
        %v1058 = vpop.f32.mrf.mxu0
        %v1059 = vadd.f32 0.0, %v1058
        %v1060 = vpop.f32.mrf.mxu0
        %v1061 = vadd.f32 0.0, %v1060
        %1062 = vmatprep.mubr.f32.mxu0 0.0
        %1063 = vmatmul.mubr.f32.gmra.mxu0 %v714
        %v1064 = vpop.f32.mrf.mxu0
        %v1065 = vadd.f32 0.0, %v1064
        %v1066 = vpop.f32.mrf.mxu0
        %v1067 = vadd.f32 0.0, %v1066
        %1068 = vmatprep.mubr.f32.mxu0 0.0
        %1069 = vmatmul.mubr.f32.gmra.mxu0 %v717
        %v1070 = vpop.f32.mrf.mxu0
        %v1071 = vadd.f32 0.0, %v1070
        %v1072 = vpop.f32.mrf.mxu0
        %v1073 = vadd.f32 0.0, %v1072
        %1074 = vdwg.mxu0
        %v1075 = vmax.f32 %v786, %v788
        %v1076 = vmax.f32 %v792, %v794
        %v1077 = vmax.f32 %v798, %v800
        %v1078 = vmax.f32 %v804, %v806
        %v1079 = vmax.f32 %v1075, %v875
        %v1080 = vmax.f32 %v1076, %v881
        %v1081 = vmax.f32 %v1077, %v887
        %v1082 = vmax.f32 %v1078, %v893
        %v1083 = vmax.f32 %v1079, %v877
        %v1084 = vmax.f32 %v1080, %v883
        %v1085 = vmax.f32 %v1081, %v889
        %v1086 = vmax.f32 %v1082, %v895
        %v1087 = vmax.f32 %v1083, %v964
        %v1088 = vmax.f32 %v1084, %v970
        %v1089 = vmax.f32 %v1085, %v976
        %v1090 = vmax.f32 %v1086, %v982
        %v1091 = vmax.f32 %v1087, %v966
        %v1092 = vmax.f32 %v1088, %v972
        %v1093 = vmax.f32 %v1089, %v978
        %v1094 = vmax.f32 %v1090, %v984
        %v1095 = vmax.f32 %v1091, %v1053
        %v1096 = vmax.f32 %v1092, %v1059
        %v1097 = vmax.f32 %v1093, %v1065
        %v1098 = vmax.f32 %v1094, %v1071
        %v1099 = vmax.f32 %v1095, %v1055
        %v1100 = vmax.f32 %v1096, %v1061
        %v1101 = vmax.f32 %v1097, %v1067
        %v1102 = vmax.f32 %v1098, %v1073
        %v1103 = vld [vmem:[%s408] sm:$0xff]
        %v1104 = vlaneseq
        %v1105 = vshrl.u32 %v1104, 7
        %v1106 = vsub.s32 0, %v1105
        %v1107 = vrot.slane %v1103, %v1106
        %v1108 = vlaneseq
        %v1109 = vshrl.u32 %v1108, 7
        %v1110 = vsub.s32 1, %v1109
        %v1111 = vrot.slane %v1103, %v1110
        %v1112 = vlaneseq
        %v1113 = vshrl.u32 %v1112, 7
        %v1114 = vsub.s32 2, %v1113
        %v1115 = vrot.slane %v1103, %v1114
        %v1116 = vlaneseq
        %v1117 = vshrl.u32 %v1116, 7
        %v1118 = vsub.s32 3, %v1117
        %v1119 = vrot.slane %v1103, %v1118
        %v1120 = vlaneseq
        %v1121 = vshrl.u32 %v1120, 7
        %v1122 = vsub.s32 4, %v1121
        %v1123 = vrot.slane %v1103, %v1122
        %v1124 = vlaneseq
        %v1125 = vshrl.u32 %v1124, 7
        %v1126 = vsub.s32 5, %v1125
        %v1127 = vrot.slane %v1103, %v1126
        %v1128 = vlaneseq
        %v1129 = vshrl.u32 %v1128, 7
        %v1130 = vsub.s32 6, %v1129
        %v1131 = vrot.slane %v1103, %v1130
        %v1132 = vlaneseq
        %v1133 = vshrl.u32 %v1132, 7
        %v1134 = vsub.s32 7, %v1133
        %v1135 = vrot.slane %v1103, %v1134
        %vm1136 = vcmp.eq.s32.totalorder %v1107, %v469
        %vm1137 = vcmp.eq.s32.totalorder %v1111, %v469
        %vm1138 = vcmp.eq.s32.totalorder %v1115, %v469
        %vm1139 = vcmp.eq.s32.totalorder %v1119, %v469
        %vm1140 = vcmp.eq.s32.totalorder %v1123, %v469
        %vm1141 = vcmp.eq.s32.totalorder %v1127, %v469
        %vm1142 = vcmp.eq.s32.totalorder %v1131, %v469
        %vm1143 = vcmp.eq.s32.totalorder %v1135, %v469
        %vm1144 = vcmp.eq.s32.totalorder %v1107, %v470
        %vm1145 = vcmp.eq.s32.totalorder %v1111, %v470
        %vm1146 = vcmp.eq.s32.totalorder %v1115, %v470
        %vm1147 = vcmp.eq.s32.totalorder %v1119, %v470
        %vm1148 = vcmp.eq.s32.totalorder %v1123, %v470
        %vm1149 = vcmp.eq.s32.totalorder %v1127, %v470
        %vm1150 = vcmp.eq.s32.totalorder %v1131, %v470
        %vm1151 = vcmp.eq.s32.totalorder %v1135, %v470
        %vm1152 = vcmp.eq.s32.totalorder %v1107, %v471
        %vm1153 = vcmp.eq.s32.totalorder %v1111, %v471
        %vm1154 = vcmp.eq.s32.totalorder %v1115, %v471
        %vm1155 = vcmp.eq.s32.totalorder %v1119, %v471
        %vm1156 = vcmp.eq.s32.totalorder %v1123, %v471
        %vm1157 = vcmp.eq.s32.totalorder %v1127, %v471
        %vm1158 = vcmp.eq.s32.totalorder %v1131, %v471
        %vm1159 = vcmp.eq.s32.totalorder %v1135, %v471
        %vm1160 = vcmp.eq.s32.totalorder %v1107, %v472
        %vm1161 = vcmp.eq.s32.totalorder %v1111, %v472
        %vm1162 = vcmp.eq.s32.totalorder %v1115, %v472
        %vm1163 = vcmp.eq.s32.totalorder %v1119, %v472
        %vm1164 = vcmp.eq.s32.totalorder %v1123, %v472
        %vm1165 = vcmp.eq.s32.totalorder %v1127, %v472
        %vm1166 = vcmp.eq.s32.totalorder %v1131, %v472
        %vm1167 = vcmp.eq.s32.totalorder %v1135, %v472
        %vm1168 = vcmp.eq.s32.totalorder %v1107, %v473
        %vm1169 = vcmp.eq.s32.totalorder %v1111, %v473
        %vm1170 = vcmp.eq.s32.totalorder %v1115, %v473
        %vm1171 = vcmp.eq.s32.totalorder %v1119, %v473
        %vm1172 = vcmp.eq.s32.totalorder %v1123, %v473
        %vm1173 = vcmp.eq.s32.totalorder %v1127, %v473
        %vm1174 = vcmp.eq.s32.totalorder %v1131, %v473
        %vm1175 = vcmp.eq.s32.totalorder %v1135, %v473
        %vm1176 = vcmp.eq.s32.totalorder %v1107, %v474
        %vm1177 = vcmp.eq.s32.totalorder %v1111, %v474
        %vm1178 = vcmp.eq.s32.totalorder %v1115, %v474
        %vm1179 = vcmp.eq.s32.totalorder %v1119, %v474
        %vm1180 = vcmp.eq.s32.totalorder %v1123, %v474
        %vm1181 = vcmp.eq.s32.totalorder %v1127, %v474
        %vm1182 = vcmp.eq.s32.totalorder %v1131, %v474
        %vm1183 = vcmp.eq.s32.totalorder %v1135, %v474
        %vm1184 = vcmp.eq.s32.totalorder %v1107, %v475
        %vm1185 = vcmp.eq.s32.totalorder %v1111, %v475
        %vm1186 = vcmp.eq.s32.totalorder %v1115, %v475
        %vm1187 = vcmp.eq.s32.totalorder %v1119, %v475
        %vm1188 = vcmp.eq.s32.totalorder %v1123, %v475
        %vm1189 = vcmp.eq.s32.totalorder %v1127, %v475
        %vm1190 = vcmp.eq.s32.totalorder %v1131, %v475
        %vm1191 = vcmp.eq.s32.totalorder %v1135, %v475
        %vm1192 = vcmp.eq.s32.totalorder %v1107, %v476
        %vm1193 = vcmp.eq.s32.totalorder %v1111, %v476
        %vm1194 = vcmp.eq.s32.totalorder %v1115, %v476
        %vm1195 = vcmp.eq.s32.totalorder %v1119, %v476
        %vm1196 = vcmp.eq.s32.totalorder %v1123, %v476
        %vm1197 = vcmp.eq.s32.totalorder %v1127, %v476
        %vm1198 = vcmp.eq.s32.totalorder %v1131, %v476
        %vm1199 = vcmp.eq.s32.totalorder %v1135, %v476
        %v1200 = vsel %vm1136, 1, 0
        %v1201 = vsel %vm1137, 1, 0
        %v1202 = vsel %vm1138, 1, 0
        %v1203 = vsel %vm1139, 1, 0
        %v1204 = vsel %vm1140, 1, 0
        %v1205 = vsel %vm1141, 1, 0
        %v1206 = vsel %vm1142, 1, 0
        %v1207 = vsel %vm1143, 1, 0
        %v1208 = vsel %vm1144, 1, 0
        %v1209 = vsel %vm1145, 1, 0
        %v1210 = vsel %vm1146, 1, 0
        %v1211 = vsel %vm1147, 1, 0
        %v1212 = vsel %vm1148, 1, 0
        %v1213 = vsel %vm1149, 1, 0
        %v1214 = vsel %vm1150, 1, 0
        %v1215 = vsel %vm1151, 1, 0
        %v1216 = vsel %vm1152, 1, 0
        %v1217 = vsel %vm1153, 1, 0
        %v1218 = vsel %vm1154, 1, 0
        %v1219 = vsel %vm1155, 1, 0
        %v1220 = vsel %vm1156, 1, 0
        %v1221 = vsel %vm1157, 1, 0
        %v1222 = vsel %vm1158, 1, 0
        %v1223 = vsel %vm1159, 1, 0
        %v1224 = vsel %vm1160, 1, 0
        %v1225 = vsel %vm1161, 1, 0
        %v1226 = vsel %vm1162, 1, 0
        %v1227 = vsel %vm1163, 1, 0
        %v1228 = vsel %vm1164, 1, 0
        %v1229 = vsel %vm1165, 1, 0
        %v1230 = vsel %vm1166, 1, 0
        %v1231 = vsel %vm1167, 1, 0
        %v1232 = vsel %vm1168, 1, 0
        %v1233 = vsel %vm1169, 1, 0
        %v1234 = vsel %vm1170, 1, 0
        %v1235 = vsel %vm1171, 1, 0
        %v1236 = vsel %vm1172, 1, 0
        %v1237 = vsel %vm1173, 1, 0
        %v1238 = vsel %vm1174, 1, 0
        %v1239 = vsel %vm1175, 1, 0
        %v1240 = vsel %vm1176, 1, 0
        %v1241 = vsel %vm1177, 1, 0
        %v1242 = vsel %vm1178, 1, 0
        %v1243 = vsel %vm1179, 1, 0
        %v1244 = vsel %vm1180, 1, 0
        %v1245 = vsel %vm1181, 1, 0
        %v1246 = vsel %vm1182, 1, 0
        %v1247 = vsel %vm1183, 1, 0
        %v1248 = vsel %vm1184, 1, 0
        %v1249 = vsel %vm1185, 1, 0
        %v1250 = vsel %vm1186, 1, 0
        %v1251 = vsel %vm1187, 1, 0
        %v1252 = vsel %vm1188, 1, 0
        %v1253 = vsel %vm1189, 1, 0
        %v1254 = vsel %vm1190, 1, 0
        %v1255 = vsel %vm1191, 1, 0
        %v1256 = vsel %vm1192, 1, 0
        %v1257 = vsel %vm1193, 1, 0
        %v1258 = vsel %vm1194, 1, 0
        %v1259 = vsel %vm1195, 1, 0
        %v1260 = vsel %vm1196, 1, 0
        %v1261 = vsel %vm1197, 1, 0
        %v1262 = vsel %vm1198, 1, 0
        %v1263 = vsel %vm1199, 1, 0
        %v1264 = vcvt.s32.f32 %v1200
        %v1265 = vcvt.s32.f32 %v1201
        %v1266 = vcvt.s32.f32 %v1202
        %v1267 = vcvt.s32.f32 %v1203
        %v1268 = vcvt.s32.f32 %v1204
        %v1269 = vcvt.s32.f32 %v1205
        %v1270 = vcvt.s32.f32 %v1206
        %v1271 = vcvt.s32.f32 %v1207
        %v1272 = vcvt.s32.f32 %v1208
        %v1273 = vcvt.s32.f32 %v1209
        %v1274 = vcvt.s32.f32 %v1210
        %v1275 = vcvt.s32.f32 %v1211
        %v1276 = vcvt.s32.f32 %v1212
        %v1277 = vcvt.s32.f32 %v1213
        %v1278 = vcvt.s32.f32 %v1214
        %v1279 = vcvt.s32.f32 %v1215
        %v1280 = vcvt.s32.f32 %v1216
        %v1281 = vcvt.s32.f32 %v1217
        %v1282 = vcvt.s32.f32 %v1218
        %v1283 = vcvt.s32.f32 %v1219
        %v1284 = vcvt.s32.f32 %v1220
        %v1285 = vcvt.s32.f32 %v1221
        %v1286 = vcvt.s32.f32 %v1222
        %v1287 = vcvt.s32.f32 %v1223
        %v1288 = vcvt.s32.f32 %v1224
        %v1289 = vcvt.s32.f32 %v1225
        %v1290 = vcvt.s32.f32 %v1226
        %v1291 = vcvt.s32.f32 %v1227
        %v1292 = vcvt.s32.f32 %v1228
        %v1293 = vcvt.s32.f32 %v1229
        %v1294 = vcvt.s32.f32 %v1230
        %v1295 = vcvt.s32.f32 %v1231
        %v1296 = vcvt.s32.f32 %v1232
        %v1297 = vcvt.s32.f32 %v1233
        %v1298 = vcvt.s32.f32 %v1234
        %v1299 = vcvt.s32.f32 %v1235
        %v1300 = vcvt.s32.f32 %v1236
        %v1301 = vcvt.s32.f32 %v1237
        %v1302 = vcvt.s32.f32 %v1238
        %v1303 = vcvt.s32.f32 %v1239
        %v1304 = vcvt.s32.f32 %v1240
        %v1305 = vcvt.s32.f32 %v1241
        %v1306 = vcvt.s32.f32 %v1242
        %v1307 = vcvt.s32.f32 %v1243
        %v1308 = vcvt.s32.f32 %v1244
        %v1309 = vcvt.s32.f32 %v1245
        %v1310 = vcvt.s32.f32 %v1246
        %v1311 = vcvt.s32.f32 %v1247
        %v1312 = vcvt.s32.f32 %v1248
        %v1313 = vcvt.s32.f32 %v1249
        %v1314 = vcvt.s32.f32 %v1250
        %v1315 = vcvt.s32.f32 %v1251
        %v1316 = vcvt.s32.f32 %v1252
        %v1317 = vcvt.s32.f32 %v1253
        %v1318 = vcvt.s32.f32 %v1254
        %v1319 = vcvt.s32.f32 %v1255
        %v1320 = vcvt.s32.f32 %v1256
        %v1321 = vcvt.s32.f32 %v1257
        %v1322 = vcvt.s32.f32 %v1258
        %v1323 = vcvt.s32.f32 %v1259
        %v1324 = vcvt.s32.f32 %v1260
        %v1325 = vcvt.s32.f32 %v1261
        %v1326 = vcvt.s32.f32 %v1262
        %v1327 = vcvt.s32.f32 %v1263
        %v1328 = vld [vmem:[#allocation6] sm:$0xff]
        %v1329 = vld [vmem:[#allocation6 + $0x8] sm:$0xff]
        %v1330 = vld [vmem:[#allocation6 + $0x10] sm:$0xff]
        %v1331 = vld [vmem:[#allocation6 + $0x18] sm:$0xff]
        %v1333 = vsel %vm706, %v1328, 0
        %v1336 = vsel %vm706, %v1329, 0
        %v1339 = vsel %vm706, %v1330, 0
        %v1342 = vsel %vm706, %v1331, 0
        %1344 = vmatprep.subr.mxu0 0.0
        %1345 = vmatpush1.msra.mxu0 0.0
        %1346 = vmatprep.subr.mxu0 0.0
        %1347 = vmatpush1.msra.mxu0 0.0
        %1348 = vmatprep.subr.mxu0 0.0
        %1349 = vmatpush1.msra.mxu0 0.0
        %1350 = vmatprep.subr.mxu0 0.0
        %1351 = vmatpush1.msra.mxu0 0.0
        %1352 = vmatprep.subr.mxu0 0.0
        %1353 = vmatpush1.msra.mxu0 0.0
        %1354 = vmatprep.subr.mxu0 0.0
        %1355 = vmatpush1.msra.mxu0 0.0
        %1356 = vmatprep.subr.mxu0 0.0
        %1357 = vmatpush1.msra.mxu0 0.0
        %1358 = vmatprep.subr.mxu0 0.0
        %1359 = vmatpush1.msra.mxu0 0.0
        %1360 = vmatprep.subr.mxu0 %v1321
        %1361 = vmatpush1.msra.mxu0 %v1320
        %1362 = vmatprep.subr.mxu0 %v1313
        %1363 = vmatpush1.msra.mxu0 %v1312
        %1364 = vmatprep.subr.mxu0 %v1305
        %1365 = vmatpush1.msra.mxu0 %v1304
        %1366 = vmatprep.subr.mxu0 %v1297
        %1367 = vmatpush1.msra.mxu0 %v1296
        %1368 = vmatprep.subr.mxu0 %v1289
        %1369 = vmatpush1.msra.mxu0 %v1288
        %1370 = vmatprep.subr.mxu0 %v1281
        %1371 = vmatpush1.msra.mxu0 %v1280
        %1372 = vmatprep.subr.mxu0 %v1273
        %1373 = vmatpush1.msra.mxu0 %v1272
        %1374 = vmatprep.subr.mxu0 %v1265
        %1375 = vmatpush1.msra.mxu0 %v1264
        %1376 = vmatprep.subr.mxu0 0.0
        %1377 = vmatpush2.msra.mxu0 0.0
        %1378 = vmatprep.subr.mxu0 0.0
        %1379 = vmatpush2.msra.mxu0 0.0
        %1380 = vmatprep.subr.mxu0 0.0
        %1381 = vmatpush2.msra.mxu0 0.0
        %1382 = vmatprep.subr.mxu0 0.0
        %1383 = vmatpush2.msra.mxu0 0.0
        %1384 = vmatprep.subr.mxu0 0.0
        %1385 = vmatpush2.msra.mxu0 0.0
        %1386 = vmatprep.subr.mxu0 0.0
        %1387 = vmatpush2.msra.mxu0 0.0
        %1388 = vmatprep.subr.mxu0 0.0
        %1389 = vmatpush2.msra.mxu0 0.0
        %1390 = vmatprep.subr.mxu0 0.0
        %1391 = vmatpush2.msra.mxu0 0.0
        %1392 = vmatprep.subr.mxu0 0.0
        %1393 = vmatpush2.msra.mxu0 0.0
        %1394 = vmatprep.subr.mxu0 0.0
        %1395 = vmatpush2.msra.mxu0 0.0
        %1396 = vmatprep.subr.mxu0 0.0
        %1397 = vmatpush2.msra.mxu0 0.0
        %1398 = vmatprep.subr.mxu0 0.0
        %1399 = vmatpush2.msra.mxu0 0.0
        %1400 = vmatprep.subr.mxu0 0.0
        %1401 = vmatpush2.msra.mxu0 0.0
        %1402 = vmatprep.subr.mxu0 0.0
        %1403 = vmatpush2.msra.mxu0 0.0
        %1404 = vmatprep.subr.mxu0 0.0
        %1405 = vmatpush2.msra.mxu0 0.0
        %1406 = vmatprep.subr.mxu0 0.0
        %1407 = vmatpush2.msra.mxu0 0.0
        %1408 = vmatprep.mubr.f32.mxu0 0.0
        %1409 = vmatmul.mubr.f32.gmra.mxu0 %v1333
        %v1410 = vpop.f32.mrf.mxu0
        %v1411 = vadd.f32 0.0, %v1410
        %v1412 = vpop.f32.mrf.mxu0
        %v1413 = vadd.f32 0.0, %v1412
        %1414 = vmatprep.mubr.f32.mxu0 0.0
        %1415 = vmatmul.mubr.f32.gmra.mxu0 %v1336
        %v1416 = vpop.f32.mrf.mxu0
        %v1417 = vadd.f32 0.0, %v1416
        %v1418 = vpop.f32.mrf.mxu0
        %v1419 = vadd.f32 0.0, %v1418
        %1420 = vmatprep.mubr.f32.mxu0 0.0
        %1421 = vmatmul.mubr.f32.gmra.mxu0 %v1339
        %v1422 = vpop.f32.mrf.mxu0
        %v1423 = vadd.f32 0.0, %v1422
        %v1424 = vpop.f32.mrf.mxu0
        %v1425 = vadd.f32 0.0, %v1424
        %1426 = vmatprep.mubr.f32.mxu0 0.0
        %1427 = vmatmul.mubr.f32.gmra.mxu0 %v1342
        %v1428 = vpop.f32.mrf.mxu0
        %v1429 = vadd.f32 0.0, %v1428
        %v1430 = vpop.f32.mrf.mxu0
        %v1431 = vadd.f32 0.0, %v1430
        %1432 = vdwg.mxu0
        %1433 = vmatprep.subr.mxu0 0.0
        %1434 = vmatpush1.msra.mxu0 0.0
        %1435 = vmatprep.subr.mxu0 0.0
        %1436 = vmatpush1.msra.mxu0 0.0
        %1437 = vmatprep.subr.mxu0 0.0
        %1438 = vmatpush1.msra.mxu0 0.0
        %1439 = vmatprep.subr.mxu0 0.0
        %1440 = vmatpush1.msra.mxu0 0.0
        %1441 = vmatprep.subr.mxu0 0.0
        %1442 = vmatpush1.msra.mxu0 0.0
        %1443 = vmatprep.subr.mxu0 0.0
        %1444 = vmatpush1.msra.mxu0 0.0
        %1445 = vmatprep.subr.mxu0 0.0
        %1446 = vmatpush1.msra.mxu0 0.0
        %1447 = vmatprep.subr.mxu0 0.0
        %1448 = vmatpush1.msra.mxu0 0.0
        %1449 = vmatprep.subr.mxu0 %v1323
        %1450 = vmatpush1.msra.mxu0 %v1322
        %1451 = vmatprep.subr.mxu0 %v1315
        %1452 = vmatpush1.msra.mxu0 %v1314
        %1453 = vmatprep.subr.mxu0 %v1307
        %1454 = vmatpush1.msra.mxu0 %v1306
        %1455 = vmatprep.subr.mxu0 %v1299
        %1456 = vmatpush1.msra.mxu0 %v1298
        %1457 = vmatprep.subr.mxu0 %v1291
        %1458 = vmatpush1.msra.mxu0 %v1290
        %1459 = vmatprep.subr.mxu0 %v1283
        %1460 = vmatpush1.msra.mxu0 %v1282
        %1461 = vmatprep.subr.mxu0 %v1275
        %1462 = vmatpush1.msra.mxu0 %v1274
        %1463 = vmatprep.subr.mxu0 %v1267
        %1464 = vmatpush1.msra.mxu0 %v1266
        %1465 = vmatprep.subr.mxu0 0.0
        %1466 = vmatpush2.msra.mxu0 0.0
        %1467 = vmatprep.subr.mxu0 0.0
        %1468 = vmatpush2.msra.mxu0 0.0
        %1469 = vmatprep.subr.mxu0 0.0
        %1470 = vmatpush2.msra.mxu0 0.0
        %1471 = vmatprep.subr.mxu0 0.0
        %1472 = vmatpush2.msra.mxu0 0.0
        %1473 = vmatprep.subr.mxu0 0.0
        %1474 = vmatpush2.msra.mxu0 0.0
        %1475 = vmatprep.subr.mxu0 0.0
        %1476 = vmatpush2.msra.mxu0 0.0
        %1477 = vmatprep.subr.mxu0 0.0
        %1478 = vmatpush2.msra.mxu0 0.0
        %1479 = vmatprep.subr.mxu0 0.0
        %1480 = vmatpush2.msra.mxu0 0.0
        %1481 = vmatprep.subr.mxu0 0.0
        %1482 = vmatpush2.msra.mxu0 0.0
        %1483 = vmatprep.subr.mxu0 0.0
        %1484 = vmatpush2.msra.mxu0 0.0
        %1485 = vmatprep.subr.mxu0 0.0
        %1486 = vmatpush2.msra.mxu0 0.0
        %1487 = vmatprep.subr.mxu0 0.0
        %1488 = vmatpush2.msra.mxu0 0.0
        %1489 = vmatprep.subr.mxu0 0.0
        %1490 = vmatpush2.msra.mxu0 0.0
        %1491 = vmatprep.subr.mxu0 0.0
        %1492 = vmatpush2.msra.mxu0 0.0
        %1493 = vmatprep.subr.mxu0 0.0
        %1494 = vmatpush2.msra.mxu0 0.0
        %1495 = vmatprep.subr.mxu0 0.0
        %1496 = vmatpush2.msra.mxu0 0.0
        %1497 = vmatprep.mubr.f32.mxu0 0.0
        %1498 = vmatmul.mubr.f32.gmra.mxu0 %v1333
        %v1499 = vpop.f32.mrf.mxu0
        %v1500 = vadd.f32 0.0, %v1499
        %v1501 = vpop.f32.mrf.mxu0
        %v1502 = vadd.f32 0.0, %v1501
        %1503 = vmatprep.mubr.f32.mxu0 0.0
        %1504 = vmatmul.mubr.f32.gmra.mxu0 %v1336
        %v1505 = vpop.f32.mrf.mxu0
        %v1506 = vadd.f32 0.0, %v1505
        %v1507 = vpop.f32.mrf.mxu0
        %v1508 = vadd.f32 0.0, %v1507
        %1509 = vmatprep.mubr.f32.mxu0 0.0
        %1510 = vmatmul.mubr.f32.gmra.mxu0 %v1339
        %v1511 = vpop.f32.mrf.mxu0
        %v1512 = vadd.f32 0.0, %v1511
        %v1513 = vpop.f32.mrf.mxu0
        %v1514 = vadd.f32 0.0, %v1513
        %1515 = vmatprep.mubr.f32.mxu0 0.0
        %1516 = vmatmul.mubr.f32.gmra.mxu0 %v1342
        %v1517 = vpop.f32.mrf.mxu0
        %v1518 = vadd.f32 0.0, %v1517
        %v1519 = vpop.f32.mrf.mxu0
        %v1520 = vadd.f32 0.0, %v1519
        %1521 = vdwg.mxu0
        %1522 = vmatprep.subr.mxu0 0.0
        %1523 = vmatpush1.msra.mxu0 0.0
        %1524 = vmatprep.subr.mxu0 0.0
        %1525 = vmatpush1.msra.mxu0 0.0
        %1526 = vmatprep.subr.mxu0 0.0
        %1527 = vmatpush1.msra.mxu0 0.0
        %1528 = vmatprep.subr.mxu0 0.0
        %1529 = vmatpush1.msra.mxu0 0.0
        %1530 = vmatprep.subr.mxu0 0.0
        %1531 = vmatpush1.msra.mxu0 0.0
        %1532 = vmatprep.subr.mxu0 0.0
        %1533 = vmatpush1.msra.mxu0 0.0
        %1534 = vmatprep.subr.mxu0 0.0
        %1535 = vmatpush1.msra.mxu0 0.0
        %1536 = vmatprep.subr.mxu0 0.0
        %1537 = vmatpush1.msra.mxu0 0.0
        %1538 = vmatprep.subr.mxu0 %v1325
        %1539 = vmatpush1.msra.mxu0 %v1324
        %1540 = vmatprep.subr.mxu0 %v1317
        %1541 = vmatpush1.msra.mxu0 %v1316
        %1542 = vmatprep.subr.mxu0 %v1309
        %1543 = vmatpush1.msra.mxu0 %v1308
        %1544 = vmatprep.subr.mxu0 %v1301
        %1545 = vmatpush1.msra.mxu0 %v1300
        %1546 = vmatprep.subr.mxu0 %v1293
        %1547 = vmatpush1.msra.mxu0 %v1292
        %1548 = vmatprep.subr.mxu0 %v1285
        %1549 = vmatpush1.msra.mxu0 %v1284
        %1550 = vmatprep.subr.mxu0 %v1277
        %1551 = vmatpush1.msra.mxu0 %v1276
        %1552 = vmatprep.subr.mxu0 %v1269
        %1553 = vmatpush1.msra.mxu0 %v1268
        %1554 = vmatprep.subr.mxu0 0.0
        %1555 = vmatpush2.msra.mxu0 0.0
        %1556 = vmatprep.subr.mxu0 0.0
        %1557 = vmatpush2.msra.mxu0 0.0
        %1558 = vmatprep.subr.mxu0 0.0
        %1559 = vmatpush2.msra.mxu0 0.0
        %1560 = vmatprep.subr.mxu0 0.0
        %1561 = vmatpush2.msra.mxu0 0.0
        %1562 = vmatprep.subr.mxu0 0.0
        %1563 = vmatpush2.msra.mxu0 0.0
        %1564 = vmatprep.subr.mxu0 0.0
        %1565 = vmatpush2.msra.mxu0 0.0
        %1566 = vmatprep.subr.mxu0 0.0
        %1567 = vmatpush2.msra.mxu0 0.0
        %1568 = vmatprep.subr.mxu0 0.0
        %1569 = vmatpush2.msra.mxu0 0.0
        %1570 = vmatprep.subr.mxu0 0.0
        %1571 = vmatpush2.msra.mxu0 0.0
        %1572 = vmatprep.subr.mxu0 0.0
        %1573 = vmatpush2.msra.mxu0 0.0
        %1574 = vmatprep.subr.mxu0 0.0
        %1575 = vmatpush2.msra.mxu0 0.0
        %1576 = vmatprep.subr.mxu0 0.0
        %1577 = vmatpush2.msra.mxu0 0.0
        %1578 = vmatprep.subr.mxu0 0.0
        %1579 = vmatpush2.msra.mxu0 0.0
        %1580 = vmatprep.subr.mxu0 0.0
        %1581 = vmatpush2.msra.mxu0 0.0
        %1582 = vmatprep.subr.mxu0 0.0
        %1583 = vmatpush2.msra.mxu0 0.0
        %1584 = vmatprep.subr.mxu0 0.0
        %1585 = vmatpush2.msra.mxu0 0.0
        %1586 = vmatprep.mubr.f32.mxu0 0.0
        %1587 = vmatmul.mubr.f32.gmra.mxu0 %v1333
        %v1588 = vpop.f32.mrf.mxu0
        %v1589 = vadd.f32 0.0, %v1588
        %v1590 = vpop.f32.mrf.mxu0
        %v1591 = vadd.f32 0.0, %v1590
        %1592 = vmatprep.mubr.f32.mxu0 0.0
        %1593 = vmatmul.mubr.f32.gmra.mxu0 %v1336
        %v1594 = vpop.f32.mrf.mxu0
        %v1595 = vadd.f32 0.0, %v1594
        %v1596 = vpop.f32.mrf.mxu0
        %v1597 = vadd.f32 0.0, %v1596
        %1598 = vmatprep.mubr.f32.mxu0 0.0
        %1599 = vmatmul.mubr.f32.gmra.mxu0 %v1339
        %v1600 = vpop.f32.mrf.mxu0
        %v1601 = vadd.f32 0.0, %v1600
        %v1602 = vpop.f32.mrf.mxu0
        %v1603 = vadd.f32 0.0, %v1602
        %1604 = vmatprep.mubr.f32.mxu0 0.0
        %1605 = vmatmul.mubr.f32.gmra.mxu0 %v1342
        %v1606 = vpop.f32.mrf.mxu0
        %v1607 = vadd.f32 0.0, %v1606
        %v1608 = vpop.f32.mrf.mxu0
        %v1609 = vadd.f32 0.0, %v1608
        %1610 = vdwg.mxu0
        %1611 = vmatprep.subr.mxu0 0.0
        %1612 = vmatpush1.msra.mxu0 0.0
        %1613 = vmatprep.subr.mxu0 0.0
        %1614 = vmatpush1.msra.mxu0 0.0
        %1615 = vmatprep.subr.mxu0 0.0
        %1616 = vmatpush1.msra.mxu0 0.0
        %1617 = vmatprep.subr.mxu0 0.0
        %1618 = vmatpush1.msra.mxu0 0.0
        %1619 = vmatprep.subr.mxu0 0.0
        %1620 = vmatpush1.msra.mxu0 0.0
        %1621 = vmatprep.subr.mxu0 0.0
        %1622 = vmatpush1.msra.mxu0 0.0
        %1623 = vmatprep.subr.mxu0 0.0
        %1624 = vmatpush1.msra.mxu0 0.0
        %1625 = vmatprep.subr.mxu0 0.0
        %1626 = vmatpush1.msra.mxu0 0.0
        %1627 = vmatprep.subr.mxu0 %v1327
        %1628 = vmatpush1.msra.mxu0 %v1326
        %1629 = vmatprep.subr.mxu0 %v1319
        %1630 = vmatpush1.msra.mxu0 %v1318
        %1631 = vmatprep.subr.mxu0 %v1311
        %1632 = vmatpush1.msra.mxu0 %v1310
        %1633 = vmatprep.subr.mxu0 %v1303
        %1634 = vmatpush1.msra.mxu0 %v1302
        %1635 = vmatprep.subr.mxu0 %v1295
        %1636 = vmatpush1.msra.mxu0 %v1294
        %1637 = vmatprep.subr.mxu0 %v1287
        %1638 = vmatpush1.msra.mxu0 %v1286
        %1639 = vmatprep.subr.mxu0 %v1279
        %1640 = vmatpush1.msra.mxu0 %v1278
        %1641 = vmatprep.subr.mxu0 %v1271
        %1642 = vmatpush1.msra.mxu0 %v1270
        %1643 = vmatprep.subr.mxu0 0.0
        %1644 = vmatpush2.msra.mxu0 0.0
        %1645 = vmatprep.subr.mxu0 0.0
        %1646 = vmatpush2.msra.mxu0 0.0
        %1647 = vmatprep.subr.mxu0 0.0
        %1648 = vmatpush2.msra.mxu0 0.0
        %1649 = vmatprep.subr.mxu0 0.0
        %1650 = vmatpush2.msra.mxu0 0.0
        %1651 = vmatprep.subr.mxu0 0.0
        %1652 = vmatpush2.msra.mxu0 0.0
        %1653 = vmatprep.subr.mxu0 0.0
        %1654 = vmatpush2.msra.mxu0 0.0
        %1655 = vmatprep.subr.mxu0 0.0
        %1656 = vmatpush2.msra.mxu0 0.0
        %1657 = vmatprep.subr.mxu0 0.0
        %1658 = vmatpush2.msra.mxu0 0.0
        %1659 = vmatprep.subr.mxu0 0.0
        %1660 = vmatpush2.msra.mxu0 0.0
        %1661 = vmatprep.subr.mxu0 0.0
        %1662 = vmatpush2.msra.mxu0 0.0
        %1663 = vmatprep.subr.mxu0 0.0
        %1664 = vmatpush2.msra.mxu0 0.0
        %1665 = vmatprep.subr.mxu0 0.0
        %1666 = vmatpush2.msra.mxu0 0.0
        %1667 = vmatprep.subr.mxu0 0.0
        %1668 = vmatpush2.msra.mxu0 0.0
        %1669 = vmatprep.subr.mxu0 0.0
        %1670 = vmatpush2.msra.mxu0 0.0
        %1671 = vmatprep.subr.mxu0 0.0
        %1672 = vmatpush2.msra.mxu0 0.0
        %1673 = vmatprep.subr.mxu0 0.0
        %1674 = vmatpush2.msra.mxu0 0.0
        %1675 = vmatprep.mubr.f32.mxu0 0.0
        %1676 = vmatmul.mubr.f32.gmra.mxu0 %v1333
        %v1677 = vpop.f32.mrf.mxu0
        %v1678 = vadd.f32 0.0, %v1677
        %v1679 = vpop.f32.mrf.mxu0
        %v1680 = vadd.f32 0.0, %v1679
        %1681 = vmatprep.mubr.f32.mxu0 0.0
        %1682 = vmatmul.mubr.f32.gmra.mxu0 %v1336
        %v1683 = vpop.f32.mrf.mxu0
        %v1684 = vadd.f32 0.0, %v1683
        %v1685 = vpop.f32.mrf.mxu0
        %v1686 = vadd.f32 0.0, %v1685
        %1687 = vmatprep.mubr.f32.mxu0 0.0
        %1688 = vmatmul.mubr.f32.gmra.mxu0 %v1339
        %v1689 = vpop.f32.mrf.mxu0
        %v1690 = vadd.f32 0.0, %v1689
        %v1691 = vpop.f32.mrf.mxu0
        %v1692 = vadd.f32 0.0, %v1691
        %1693 = vmatprep.mubr.f32.mxu0 0.0
        %1694 = vmatmul.mubr.f32.gmra.mxu0 %v1342
        %v1695 = vpop.f32.mrf.mxu0
        %v1696 = vadd.f32 0.0, %v1695
        %v1697 = vpop.f32.mrf.mxu0
        %v1698 = vadd.f32 0.0, %v1697
        %1699 = vdwg.mxu0
        %v1700 = vmax.f32 %v1411, %v1413
        %v1701 = vmax.f32 %v1417, %v1419
        %v1702 = vmax.f32 %v1423, %v1425
        %v1703 = vmax.f32 %v1429, %v1431
        %v1704 = vmax.f32 %v1700, %v1500
        %v1705 = vmax.f32 %v1701, %v1506
        %v1706 = vmax.f32 %v1702, %v1512
        %v1707 = vmax.f32 %v1703, %v1518
        %v1708 = vmax.f32 %v1704, %v1502
        %v1709 = vmax.f32 %v1705, %v1508
        %v1710 = vmax.f32 %v1706, %v1514
        %v1711 = vmax.f32 %v1707, %v1520
        %v1712 = vmax.f32 %v1708, %v1589
        %v1713 = vmax.f32 %v1709, %v1595
        %v1714 = vmax.f32 %v1710, %v1601
        %v1715 = vmax.f32 %v1711, %v1607
        %v1716 = vmax.f32 %v1712, %v1591
        %v1717 = vmax.f32 %v1713, %v1597
        %v1718 = vmax.f32 %v1714, %v1603
        %v1719 = vmax.f32 %v1715, %v1609
        %v1720 = vmax.f32 %v1716, %v1678
        %v1721 = vmax.f32 %v1717, %v1684
        %v1722 = vmax.f32 %v1718, %v1690
        %v1723 = vmax.f32 %v1719, %v1696
        %v1724 = vmax.f32 %v1720, %v1680
        %v1725 = vmax.f32 %v1721, %v1686
        %v1726 = vmax.f32 %v1722, %v1692
        %v1727 = vmax.f32 %v1723, %v1698
        %v1728 = vld [vmem:[#allocation8] sm:$0xff]
        %v1729 = vld [vmem:[#allocation8 + $0x8] sm:$0xff]
        %v1730 = vld [vmem:[#allocation8 + $0x10] sm:$0xff]
        %v1731 = vld [vmem:[#allocation8 + $0x18] sm:$0xff]
        %v1732 = vld [vmem:[#allocation9] sm:$0xff]
        %v1733 = vld [vmem:[#allocation9 + $0x8] sm:$0xff]
        %v1734 = vld [vmem:[#allocation9 + $0x10] sm:$0xff]
        %v1735 = vld [vmem:[#allocation9 + $0x18] sm:$0xff]
        %vm1736 = vcmask 261120
        %v1738 = vsel %vm1736, %v1732, 0
        %v1741 = vsel %vm1736, %v1733, 0
        %v1744 = vsel %vm1736, %v1734, 0
        %v1747 = vsel %vm1736, %v1735, 0
        %1749 = vmatprep.subr.mxu0 0.0
        %1750 = vmatpush1.msra.mxu0 0.0
        %1751 = vmatprep.subr.mxu0 0.0
        %1752 = vmatpush1.msra.mxu0 0.0
        %1753 = vmatprep.subr.mxu0 0.0
        %1754 = vmatpush1.msra.mxu0 0.0
        %1755 = vmatprep.subr.mxu0 0.0
        %1756 = vmatpush1.msra.mxu0 0.0
        %1757 = vmatprep.subr.mxu0 0.0
        %1758 = vmatpush1.msra.mxu0 0.0
        %1759 = vmatprep.subr.mxu0 0.0
        %1760 = vmatpush1.msra.mxu0 0.0
        %1761 = vmatprep.subr.mxu0 0.0
        %1762 = vmatpush1.msra.mxu0 0.0
        %1763 = vmatprep.subr.mxu0 0.0
        %1764 = vmatpush1.msra.mxu0 0.0
        %1765 = vmatprep.subr.mxu0 0.0
        %1766 = vmatpush1.msra.mxu0 0.0
        %1767 = vmatprep.subr.mxu0 0.0
        %1768 = vmatpush1.msra.mxu0 0.0
        %1769 = vmatprep.subr.mxu0 0.0
        %1770 = vmatpush1.msra.mxu0 0.0
        %1771 = vmatprep.subr.mxu0 0.0
        %1772 = vmatpush1.msra.mxu0 0.0
        %1773 = vmatprep.subr.mxu0 0.0
        %1774 = vmatpush1.msra.mxu0 %v1727
        %1775 = vmatprep.subr.mxu0 0.0
        %1776 = vmatpush1.msra.mxu0 %v1726
        %1777 = vmatprep.subr.mxu0 0.0
        %1778 = vmatpush1.msra.mxu0 %v1725
        %1779 = vmatprep.subr.mxu0 0.0
        %1780 = vmatpush1.msra.mxu0 %v1724
        %1781 = vmatprep.subr.mxu0 0.0
        %1782 = vmatpush2.msra.mxu0 0.0
        %1783 = vmatprep.subr.mxu0 0.0
        %1784 = vmatpush2.msra.mxu0 0.0
        %1785 = vmatprep.subr.mxu0 0.0
        %1786 = vmatpush2.msra.mxu0 0.0
        %1787 = vmatprep.subr.mxu0 0.0
        %1788 = vmatpush2.msra.mxu0 0.0
        %1789 = vmatprep.subr.mxu0 0.0
        %1790 = vmatpush2.msra.mxu0 0.0
        %1791 = vmatprep.subr.mxu0 0.0
        %1792 = vmatpush2.msra.mxu0 0.0
        %1793 = vmatprep.subr.mxu0 0.0
        %1794 = vmatpush2.msra.mxu0 0.0
        %1795 = vmatprep.subr.mxu0 0.0
        %1796 = vmatpush2.msra.mxu0 0.0
        %1797 = vmatprep.subr.mxu0 0.0
        %1798 = vmatpush2.msra.mxu0 0.0
        %1799 = vmatprep.subr.mxu0 0.0
        %1800 = vmatpush2.msra.mxu0 0.0
        %1801 = vmatprep.subr.mxu0 0.0
        %1802 = vmatpush2.msra.mxu0 0.0
        %1803 = vmatprep.subr.mxu0 0.0
        %1804 = vmatpush2.msra.mxu0 0.0
        %1805 = vmatprep.subr.mxu0 0.0
        %1806 = vmatpush2.msra.mxu0 0.0
        %1807 = vmatprep.subr.mxu0 0.0
        %1808 = vmatpush2.msra.mxu0 0.0
        %1809 = vmatprep.subr.mxu0 0.0
        %1810 = vmatpush2.msra.mxu0 0.0
        %1811 = vmatprep.subr.mxu0 0.0
        %1812 = vmatpush2.msra.mxu0 0.0
        %1813 = vmatprep.mubr.f32.mxu0 0.0
        %1814 = vmatmul.mubr.f32.gmra.mxu0 %v1738
        %v1815 = vpop.f32.mrf.mxu0
        %v1816 = vadd.f32 0.0, %v1815
        %v1817 = vpop.f32.mrf.mxu0
        %1818 = vmatprep.mubr.f32.mxu0 0.0
        %1819 = vmatmul.mubr.f32.gmra.mxu0 %v1741
        %v1820 = vpop.f32.mrf.mxu0
        %v1821 = vadd.f32 0.0, %v1820
        %v1822 = vpop.f32.mrf.mxu0
        %1823 = vmatprep.mubr.f32.mxu0 0.0
        %1824 = vmatmul.mubr.f32.gmra.mxu0 %v1744
        %v1825 = vpop.f32.mrf.mxu0
        %v1826 = vadd.f32 0.0, %v1825
        %v1827 = vpop.f32.mrf.mxu0
        %1828 = vmatprep.mubr.f32.mxu0 0.0
        %1829 = vmatmul.mubr.f32.gmra.mxu0 %v1747
        %v1830 = vpop.f32.mrf.mxu0
        %v1831 = vadd.f32 0.0, %v1830
        %v1832 = vpop.f32.mrf.mxu0
        %1833 = vdwg.mxu0
        %v1835 = vsel %vm1736, %v1728, 0
        %v1838 = vsel %vm1736, %v1729, 0
        %v1841 = vsel %vm1736, %v1730, 0
        %v1844 = vsel %vm1736, %v1731, 0
        %1846 = vmatprep.subr.mxu0 0.0
        %1847 = vmatpush1.msra.mxu0 0.0
        %1848 = vmatprep.subr.mxu0 0.0
        %1849 = vmatpush1.msra.mxu0 0.0
        %1850 = vmatprep.subr.mxu0 0.0
        %1851 = vmatpush1.msra.mxu0 0.0
        %1852 = vmatprep.subr.mxu0 0.0
        %1853 = vmatpush1.msra.mxu0 0.0
        %1854 = vmatprep.subr.mxu0 0.0
        %1855 = vmatpush1.msra.mxu0 0.0
        %1856 = vmatprep.subr.mxu0 0.0
        %1857 = vmatpush1.msra.mxu0 0.0
        %1858 = vmatprep.subr.mxu0 0.0
        %1859 = vmatpush1.msra.mxu0 0.0
        %1860 = vmatprep.subr.mxu0 0.0
        %1861 = vmatpush1.msra.mxu0 0.0
        %1862 = vmatprep.subr.mxu0 0.0
        %1863 = vmatpush1.msra.mxu0 0.0
        %1864 = vmatprep.subr.mxu0 0.0
        %1865 = vmatpush1.msra.mxu0 0.0
        %1866 = vmatprep.subr.mxu0 0.0
        %1867 = vmatpush1.msra.mxu0 0.0
        %1868 = vmatprep.subr.mxu0 0.0
        %1869 = vmatpush1.msra.mxu0 0.0
        %1870 = vmatprep.subr.mxu0 0.0
        %1871 = vmatpush1.msra.mxu0 %v1102
        %1872 = vmatprep.subr.mxu0 0.0
        %1873 = vmatpush1.msra.mxu0 %v1101
        %1874 = vmatprep.subr.mxu0 0.0
        %1875 = vmatpush1.msra.mxu0 %v1100
        %1876 = vmatprep.subr.mxu0 0.0
        %1877 = vmatpush1.msra.mxu0 %v1099
        %1878 = vmatprep.subr.mxu0 0.0
        %1879 = vmatpush2.msra.mxu0 0.0
        %1880 = vmatprep.subr.mxu0 0.0
        %1881 = vmatpush2.msra.mxu0 0.0
        %1882 = vmatprep.subr.mxu0 0.0
        %1883 = vmatpush2.msra.mxu0 0.0
        %1884 = vmatprep.subr.mxu0 0.0
        %1885 = vmatpush2.msra.mxu0 0.0
        %1886 = vmatprep.subr.mxu0 0.0
        %1887 = vmatpush2.msra.mxu0 0.0
        %1888 = vmatprep.subr.mxu0 0.0
        %1889 = vmatpush2.msra.mxu0 0.0
        %1890 = vmatprep.subr.mxu0 0.0
        %1891 = vmatpush2.msra.mxu0 0.0
        %1892 = vmatprep.subr.mxu0 0.0
        %1893 = vmatpush2.msra.mxu0 0.0
        %1894 = vmatprep.subr.mxu0 0.0
        %1895 = vmatpush2.msra.mxu0 0.0
        %1896 = vmatprep.subr.mxu0 0.0
        %1897 = vmatpush2.msra.mxu0 0.0
        %1898 = vmatprep.subr.mxu0 0.0
        %1899 = vmatpush2.msra.mxu0 0.0
        %1900 = vmatprep.subr.mxu0 0.0
        %1901 = vmatpush2.msra.mxu0 0.0
        %1902 = vmatprep.subr.mxu0 0.0
        %1903 = vmatpush2.msra.mxu0 0.0
        %1904 = vmatprep.subr.mxu0 0.0
        %1905 = vmatpush2.msra.mxu0 0.0
        %1906 = vmatprep.subr.mxu0 0.0
        %1907 = vmatpush2.msra.mxu0 0.0
        %1908 = vmatprep.subr.mxu0 0.0
        %1909 = vmatpush2.msra.mxu0 0.0
        %1910 = vmatprep.mubr.f32.mxu0 0.0
        %1911 = vmatmul.mubr.f32.gmra.mxu0 %v1835
        %v1912 = vpop.f32.mrf.mxu0
        %v1913 = vadd.f32 %v1816, %v1912
        %v1914 = vpop.f32.mrf.mxu0
        %1915 = vmatprep.mubr.f32.mxu0 0.0
        %1916 = vmatmul.mubr.f32.gmra.mxu0 %v1838
        %v1917 = vpop.f32.mrf.mxu0
        %v1918 = vadd.f32 %v1821, %v1917
        %v1919 = vpop.f32.mrf.mxu0
        %1920 = vmatprep.mubr.f32.mxu0 0.0
        %1921 = vmatmul.mubr.f32.gmra.mxu0 %v1841
        %v1922 = vpop.f32.mrf.mxu0
        %v1923 = vadd.f32 %v1826, %v1922
        %v1924 = vpop.f32.mrf.mxu0
        %1925 = vmatprep.mubr.f32.mxu0 0.0
        %1926 = vmatmul.mubr.f32.gmra.mxu0 %v1844
        %v1927 = vpop.f32.mrf.mxu0
        %v1928 = vadd.f32 %v1831, %v1927
        %v1929 = vpop.f32.mrf.mxu0
        %1930 = vdwg.mxu0
        %v1931 = vld [vmem:[%s6] sm:$0xff]
        %v1932 = vld [vmem:[%s6 + $0x8] sm:$0xff]
        %v1933 = vld [vmem:[%s6 + $0x10] sm:$0xff]
        %v1934 = vld [vmem:[%s6 + $0x18] sm:$0xff]
        %1936 = vset.pattern.permute.xlu0 0
        %1937 = vperm.xlu0 %1936, %v1931
        %v1938 = vpop.permute.xlu0 %1937
        %1941 = vset.pattern.permute.xlu0 0
        %1942 = vperm.xlu0 %1941, %v1932
        %v1943 = vpop.permute.xlu0 %1942
        %1946 = vset.pattern.permute.xlu0 0
        %1947 = vperm.xlu0 %1946, %v1933
        %v1948 = vpop.permute.xlu0 %1947
        %1951 = vset.pattern.permute.xlu0 0
        %1952 = vperm.xlu0 %1951, %v1934
        %v1953 = vpop.permute.xlu0 %1952
        %v1955 = vadd.f32 %v1913, %v1938
        %v1956 = vadd.f32 %v1918, %v1943
        %v1957 = vadd.f32 %v1923, %v1948
        %v1958 = vadd.f32 %v1928, %v1953
        %v1959 = vmax.f32 %v1955, 0.0
        %v1960 = vmax.f32 %v1956, 0.0
        %v1961 = vmax.f32 %v1957, 0.0
        %v1962 = vmax.f32 %v1958, 0.0
        %v1963 = vld [vmem:[%s7] sm:$0xff]
        %v1964 = vld [vmem:[%s7 + $0x8] sm:$0xff]
        %v1965 = vld [vmem:[%s8] sm:$0xff]
        %v1966 = vld [vmem:[%s8 + $0x8] sm:$0xff]
        %1968 = vset.pattern.permute.xlu0 0
        %1969 = vperm.xlu0 %1968, %v1965
        %v1970 = vpop.permute.xlu0 %1969
        %1973 = vset.pattern.permute.xlu0 0
        %1974 = vperm.xlu0 %1973, %v1966
        %v1975 = vpop.permute.xlu0 %1974
        %v1978 = vsel %vm1736, %v1963, 0
        %v1981 = vsel %vm1736, %v1964, 0
        %1983 = vmatprep.subr.mxu0 0.0
        %1984 = vmatpush1.msra.mxu0 0.0
        %1985 = vmatprep.subr.mxu0 0.0
        %1986 = vmatpush1.msra.mxu0 0.0
        %1987 = vmatprep.subr.mxu0 0.0
        %1988 = vmatpush1.msra.mxu0 0.0
        %1989 = vmatprep.subr.mxu0 0.0
        %1990 = vmatpush1.msra.mxu0 0.0
        %1991 = vmatprep.subr.mxu0 0.0
        %1992 = vmatpush1.msra.mxu0 0.0
        %1993 = vmatprep.subr.mxu0 0.0
        %1994 = vmatpush1.msra.mxu0 0.0
        %1995 = vmatprep.subr.mxu0 0.0
        %1996 = vmatpush1.msra.mxu0 0.0
        %1997 = vmatprep.subr.mxu0 0.0
        %1998 = vmatpush1.msra.mxu0 0.0
        %1999 = vmatprep.subr.mxu0 0.0
        %2000 = vmatpush1.msra.mxu0 0.0
        %2001 = vmatprep.subr.mxu0 0.0
        %2002 = vmatpush1.msra.mxu0 0.0
        %2003 = vmatprep.subr.mxu0 0.0
        %2004 = vmatpush1.msra.mxu0 0.0
        %2005 = vmatprep.subr.mxu0 0.0
        %2006 = vmatpush1.msra.mxu0 0.0
        %2007 = vmatprep.subr.mxu0 0.0
        %2008 = vmatpush1.msra.mxu0 %v1962
        %2009 = vmatprep.subr.mxu0 0.0
        %2010 = vmatpush1.msra.mxu0 %v1961
        %2011 = vmatprep.subr.mxu0 0.0
        %2012 = vmatpush1.msra.mxu0 %v1960
        %2013 = vmatprep.subr.mxu0 0.0
        %2014 = vmatpush1.msra.mxu0 %v1959
        %2015 = vmatprep.subr.mxu0 0.0
        %2016 = vmatpush2.msra.mxu0 0.0
        %2017 = vmatprep.subr.mxu0 0.0
        %2018 = vmatpush2.msra.mxu0 0.0
        %2019 = vmatprep.subr.mxu0 0.0
        %2020 = vmatpush2.msra.mxu0 0.0
        %2021 = vmatprep.subr.mxu0 0.0
        %2022 = vmatpush2.msra.mxu0 0.0
        %2023 = vmatprep.subr.mxu0 0.0
        %2024 = vmatpush2.msra.mxu0 0.0
        %2025 = vmatprep.subr.mxu0 0.0
        %2026 = vmatpush2.msra.mxu0 0.0
        %2027 = vmatprep.subr.mxu0 0.0
        %2028 = vmatpush2.msra.mxu0 0.0
        %2029 = vmatprep.subr.mxu0 0.0
        %2030 = vmatpush2.msra.mxu0 0.0
        %2031 = vmatprep.subr.mxu0 0.0
        %2032 = vmatpush2.msra.mxu0 0.0
        %2033 = vmatprep.subr.mxu0 0.0
        %2034 = vmatpush2.msra.mxu0 0.0
        %2035 = vmatprep.subr.mxu0 0.0
        %2036 = vmatpush2.msra.mxu0 0.0
        %2037 = vmatprep.subr.mxu0 0.0
        %2038 = vmatpush2.msra.mxu0 0.0
        %2039 = vmatprep.subr.mxu0 0.0
        %2040 = vmatpush2.msra.mxu0 0.0
        %2041 = vmatprep.subr.mxu0 0.0
        %2042 = vmatpush2.msra.mxu0 0.0
        %2043 = vmatprep.subr.mxu0 0.0
        %2044 = vmatpush2.msra.mxu0 0.0
        %2045 = vmatprep.subr.mxu0 0.0
        %2046 = vmatpush2.msra.mxu0 0.0
        %2047 = vmatprep.mubr.f32.mxu0 0.0
        %2048 = vmatmul.mubr.f32.gmra.mxu0 %v1978
        %v2049 = vpop.f32.mrf.mxu0
        %v2050 = vadd.f32 %v1970, %v2049
        %v2051 = vpop.f32.mrf.mxu0
        %2052 = vmatprep.mubr.f32.mxu0 0.0
        %2053 = vmatmul.mubr.f32.gmra.mxu0 %v1981
        %v2054 = vpop.f32.mrf.mxu0
        %v2055 = vadd.f32 %v1975, %v2054
        %v2056 = vpop.f32.mrf.mxu0
        %2057 = vdwg.mxu0
        %v2058 = vmax.f32 %v2050, 0.0
        %v2059 = vmax.f32 %v2055, 0.0
        %v2060 = vld [vmem:[%s9] sm:$0x1]
        %v2061 = vld [vmem:[#allocation2] sm:$0x1]
        %2063 = vset.pattern.permute.xlu0 0
        %2064 = vperm.xlu0 %2063, %v2061
        %v2065 = vpop.permute.xlu0 %2064
        %v2067 = vlaneseq
        %v2068 = vshrl.u32 %v2067, 7
        %v2069 = vsub.s32 0, %v2068
        %v2070 = vrot.slane %v2065, %v2069
        %vm2071 = vcmask 130048
        %v2073 = vsel %vm2071, %v2060, 0
        %2075 = vmatprep.subr.mxu0 0.0
        %2076 = vmatpush1.msra.mxu0 0.0
        %2077 = vmatprep.subr.mxu0 0.0
        %2078 = vmatpush1.msra.mxu0 0.0
        %2079 = vmatprep.subr.mxu0 0.0
        %2080 = vmatpush1.msra.mxu0 0.0
        %2081 = vmatprep.subr.mxu0 0.0
        %2082 = vmatpush1.msra.mxu0 0.0
        %2083 = vmatprep.subr.mxu0 0.0
        %2084 = vmatpush1.msra.mxu0 0.0
        %2085 = vmatprep.subr.mxu0 0.0
        %2086 = vmatpush1.msra.mxu0 0.0
        %2087 = vmatprep.subr.mxu0 0.0
        %2088 = vmatpush1.msra.mxu0 0.0
        %2089 = vmatprep.subr.mxu0 0.0
        %2090 = vmatpush1.msra.mxu0 0.0
        %2091 = vmatprep.subr.mxu0 0.0
        %2092 = vmatpush1.msra.mxu0 0.0
        %2093 = vmatprep.subr.mxu0 0.0
        %2094 = vmatpush1.msra.mxu0 0.0
        %2095 = vmatprep.subr.mxu0 0.0
        %2096 = vmatpush1.msra.mxu0 0.0
        %2097 = vmatprep.subr.mxu0 0.0
        %2098 = vmatpush1.msra.mxu0 0.0
        %2099 = vmatprep.subr.mxu0 0.0
        %2100 = vmatpush1.msra.mxu0 0.0
        %2101 = vmatprep.subr.mxu0 0.0
        %2102 = vmatpush1.msra.mxu0 0.0
        %2103 = vmatprep.subr.mxu0 0.0
        %2104 = vmatpush1.msra.mxu0 %v2059
        %2105 = vmatprep.subr.mxu0 0.0
        %2106 = vmatpush1.msra.mxu0 %v2058
        %2107 = vmatprep.subr.mxu0 0.0
        %2108 = vmatpush2.msra.mxu0 0.0
        %2109 = vmatprep.subr.mxu0 0.0
        %2110 = vmatpush2.msra.mxu0 0.0
        %2111 = vmatprep.subr.mxu0 0.0
        %2112 = vmatpush2.msra.mxu0 0.0
        %2113 = vmatprep.subr.mxu0 0.0
        %2114 = vmatpush2.msra.mxu0 0.0
        %2115 = vmatprep.subr.mxu0 0.0
        %2116 = vmatpush2.msra.mxu0 0.0
        %2117 = vmatprep.subr.mxu0 0.0
        %2118 = vmatpush2.msra.mxu0 0.0
        %2119 = vmatprep.subr.mxu0 0.0
        %2120 = vmatpush2.msra.mxu0 0.0
        %2121 = vmatprep.subr.mxu0 0.0
        %2122 = vmatpush2.msra.mxu0 0.0
        %2123 = vmatprep.subr.mxu0 0.0
        %2124 = vmatpush2.msra.mxu0 0.0
        %2125 = vmatprep.subr.mxu0 0.0
        %2126 = vmatpush2.msra.mxu0 0.0
        %2127 = vmatprep.subr.mxu0 0.0
        %2128 = vmatpush2.msra.mxu0 0.0
        %2129 = vmatprep.subr.mxu0 0.0
        %2130 = vmatpush2.msra.mxu0 0.0
        %2131 = vmatprep.subr.mxu0 0.0
        %2132 = vmatpush2.msra.mxu0 0.0
        %2133 = vmatprep.subr.mxu0 0.0
        %2134 = vmatpush2.msra.mxu0 0.0
        %2135 = vmatprep.subr.mxu0 0.0
        %2136 = vmatpush2.msra.mxu0 0.0
        %2137 = vmatprep.subr.mxu0 0.0
        %2138 = vmatpush2.msra.mxu0 0.0
        %2139 = vmatprep.mubr.f32.mxu0 0.0
        %2140 = vmatmul.mubr.f32.gmra.mxu0 %v2073
        %v2141 = vpop.f32.mrf.mxu0
        %v2142 = vadd.f32 %v2070, %v2141
        %v2143 = vpop.f32.mrf.mxu0
        %2144 = vdwg.mxu0
        %v2145 = vxor.u32 %v2142, 2147483648
        %v2146 = vmul.f32 %v2145, 1.442695
        %v2147 = vpow.pop %v2146
        %v2148 = vadd.f32 %v2147, 1.0
        %v2149 = vrcp.pop %v2148
        %v2150 = vmul.f32 1.0, %v2149
        %2151 = vst [vmem:[%s461] sm:$0x1] %v2150
        %s2152 = sand.u32 %s281, 1
        %s2153 = scalar_lea.sflag [#allocation5], %s2152
        %s2154 = sand.u32 %s281, 1
        %s2155 = scalar_lea.vmem [#allocation11], %s2154
        // Predicated region
        $region81: #{tpu_custom_call.1} parent=63 // pred_check
          %p2156 = pneg %p291
        $region82: #{tpu_custom_call.1} parent=63 // pred_check_branch
          %2158 = sbr.rel (%p2156) target = $region84
        $region83: #{tpu_custom_call.1} parent=63 // pred_region
          %s2160 = ssub.s32 16, 16
          %2161 = vsyncadd %s2153, %s2160
          %s2162 = smul.addr %s32, 16
          %s2163 = scalar_lea.hbm %s11, %s2162
          %s2165 = sshll.u32 %s2155, 4
          %s2166 = int_to_ptr.vmem [resolvable:$true] %s2165
          %2168 = dma.vmem_to_hbm [thread:$0]  %s2166, 16, %s2163, %s2153
        $region84: #{tpu_custom_call.1} parent=63 // pred_fallthru
          _
      $region64: #{tpu_custom_call.1} parent=5 // pred_fallthru
        _
      %p2169 = scmp.le.s32.totalorder 2, %s27
      // Predicated region
      $region85: #{tpu_custom_call.1} parent=5 // pred_check
        %p2170 = pneg %p2169
      $region86: #{tpu_custom_call.1} parent=5 // pred_check_branch
        %2172 = sbr.rel (%p2170) target = $region88
      $region87: #{tpu_custom_call.1} parent=5 // pred_region
        %s2173 = ssub.s32 %s27, 2
        // Predicated region
        $region89: #{tpu_custom_call.1} parent=87 // pred_check
          %p2174 = pneg %p297
        $region90: #{tpu_custom_call.1} parent=87 // pred_check_branch
          %2176 = sbr.rel (%p2174) target = $region92
        $region91: #{tpu_custom_call.1} parent=87 // pred_region
          %s2177 = sand.u32 %s282, 1
          %s2178 = scalar_lea.sflag [#allocation5], %s2177
          %s2179 = sand.u32 %s282, 1
          %s2180 = scalar_lea.vmem [#allocation11], %s2179
          %2181 = dma.done %s2178, 16
        $region92: #{tpu_custom_call.1} parent=87 // pred_fallthru
          _
      $region88: #{tpu_custom_call.1} parent=5 // pred_fallthru
        _
    $region6: #{tpu_custom_call.1} parent=1 // loop_footer
      %s31 = sadd.s32 1, %s27
    $region7: #{tpu_custom_call.1} parent=1 // loop_footer_branch
      %26 = sbr.rel target = $region3
    $region8: #{tpu_custom_call.1} parent=1 // loop_exit
      _
    %2182 = vsyncpa [#allocation4], 1
    %s2183 = scalar_lea.sflag [#allocation4], 1
    %2184 = vsyncpa %s2183, 1
    %2185 = vsyncpa [#allocation7], 1
    %2186 = vsyncpa [#allocation10], 1
    %2187 = vsyncpa [#allocation5], 1
    %s2188 = scalar_lea.sflag [#allocation5], 1
    %2189 = vsyncpa %s2188, 1

</llo_original>
